<compile_context>
chip_gen: v7x
topology: tpu7x:2x2x1
jax: 0.10.0
libtpu: 0.0.40
codegen_flags: <defaults>
</compile_context>

<pallas_src>
import functools

import jax
import jax.numpy as jnp
from jax.experimental import pallas as pl
from jax.experimental.pallas import tpu as pltpu

NUM_EXPERTS = 4


# --------------------------------------------------------------------------
# in-kernel helpers (traced inside Pallas kernel bodies)
# --------------------------------------------------------------------------
def _unbiased_std(v):
    """torch.std default: unbiased (ddof=1) over the last axis. v: [1, D]."""
    m = jnp.mean(v, axis=-1, keepdims=True)
    d = v - m
    var = jnp.sum(d * d, axis=-1, keepdims=True) / (v.shape[-1] - 1)
    return jnp.sqrt(var)                                   # [1, 1]


# --------------------------------------------------------------------------
# pass 1: per-batch router scale  (grid=(B,), "arbitrary")
# --------------------------------------------------------------------------
def mm_router_scale_kernel(x_ref, wri_ref, bri_ref, wrt_ref, brt_ref, scale_ref,
                           *, split_loc, inv_t):
    """One batch row per grid step -> writes one row of scale [B, NE*r]."""
    b = pl.program_id(0)
    x = x_ref[...]                                         # [S, D] f32
    x_img = x[:split_loc, :]
    x_text = x[split_loc:, :]

    # Collapsed IEB: mean over rows commutes with the (linear) fusion, so the
    # [S,S]-class matmuls reduce to [1,.] matvecs per modality.
    m_img = jnp.mean(x_img, axis=0, keepdims=True)         # [1, D]
    m_text = jnp.mean(x_text, axis=0, keepdims=True)       # [1, D]

    dn = (((1,), (1,)), ((), ()))                          # a @ b^T without a transpose
    img_avg = m_img + jnp.dot(
        jax.lax.dot_general(m_img, x_text, dn, preferred_element_type=jnp.float32),
        x_text, preferred_element_type=jnp.float32)
    text_avg = m_text + jnp.dot(
        jax.lax.dot_general(m_text, x_img, dn, preferred_element_type=jnp.float32),
        x_img, preferred_element_type=jnp.float32)

    # WMB: unbiased std + temperature softmax over the 2 modalities (exact).
    s_i = _unbiased_std(img_avg)
    s_t = _unbiased_std(text_avg)
    mx = jnp.maximum(s_i, s_t)
    e_i = jnp.exp((s_i - mx) * inv_t)
    e_t = jnp.exp((s_t - mx) * inv_t)
    inv = 1.0 / (e_i + e_t)        # exact: one scalar per batch, keeps f32 parity
    w_i = e_i * inv
    w_t = e_t * inv

    # Router weights have the per-expert column expansion pre-folded (wrapper),
    # so the matvecs directly emit the [1, NE*r] per-column scale.
    r_img = jnp.dot(img_avg, wri_ref[...], preferred_element_type=jnp.float32) + bri_ref[...]
    r_txt = jnp.dot(text_avg, wrt_ref[...], preferred_element_type=jnp.float32) + brt_ref[...]
    scale_ref[pl.ds(b, 1), :] = r_img * w_i + r_txt * w_t  # [1, NE*r]


# --------------------------------------------------------------------------
# pass 2: tiled base + packed-LoRA matmuls  (grid=(B, S//tile_m), all parallel)
# --------------------------------------------------------------------------
def mm_lora_matmul_kernel(x_ref, scale_ref, wt_ref, bb_ref, ap_ref, bp_ref, o_ref):
    b = pl.program_id(0)
    x = x_ref[...].astype(wt_ref.dtype)                    # MXU operand dtype (f32/bf16)

    base = jnp.dot(x, wt_ref[...], preferred_element_type=jnp.float32) + bb_ref[...]
    h = jnp.dot(x, ap_ref[...], preferred_element_type=jnp.float32)   # [tile_m, NE*r] f32

    scale = scale_ref[pl.ds(b, 1), :]                      # [1, NE*r] per-batch expert scale
    mixed = jnp.dot((h * scale).astype(bp_ref.dtype), bp_ref[...],
                    preferred_element_type=jnp.float32)    # [tile_m, O_pad]

    o_ref[...] = (base + mixed).astype(o_ref.dtype)


# --------------------------------------------------------------------------
# wrapper
# --------------------------------------------------------------------------
def _pick_tile_m(seq, target=256):
    """Largest multiple of 8 that divides `seq` and is <= target (else seq)."""
    best = seq
    for cand in range(8, min(seq, target) + 1, 8):
        if seq % cand == 0:
            best = cand
    return best


def _resident_spec(shape, single_buffer):
    """Full-array, constant-index BlockSpec; single-buffered when supported."""
    index_map = lambda *_: (0,) * len(shape)
    if single_buffer:
        try:
            return pl.BlockSpec(shape, index_map, pipeline_mode=pl.Buffered(1))
        except TypeError:       # older builds without pipeline_mode on BlockSpec
            pass
    return pl.BlockSpec(shape, index_map)


def mm_linear_forward(x, params, *, scaling, split_loc, t,
                      compute_dtype=jnp.float32, tile_m=None,
                      single_buffer_weights=True):
    B, S, D = x.shape
    O = params["w_base"].shape[0]
    r = params["a1"].shape[0]
    ne = NUM_EXPERTS

    if S % 8 != 0 or split_loc % 8 != 0:
        raise ValueError("S and split_loc must be multiples of 8 "
                         "(sublane-aligned IEB slices)")
    if not 0 < split_loc < S:
        raise ValueError("split_loc must lie strictly inside the sequence")

    o_pad = ((O + 127) // 128) * 128       # lane-dense output/weight N dim
    inv_t = 1.0 / float(t)
    f32 = jnp.float32

    # ---- one-time layout / packing work, done in XLA outside the kernels ----
    wt = jnp.pad(params["w_base"].T.astype(compute_dtype),
                 ((0, 0), (0, o_pad - O)))                                   # [D, O_pad]
    bb = jnp.pad(params["b_base"].astype(f32), ((0, 0), (0, o_pad - O)))     # [1, O_pad]
    ap = jnp.concatenate([params[f"a{k}"].T for k in range(1, ne + 1)],
                         axis=1).astype(compute_dtype)                       # [D, NE*r]
    bp = jnp.concatenate([params[f"b{k}"].T for k in range(1, ne + 1)],
                         axis=0).astype(f32) * scaling                       # scaling folded in
    bp = jnp.pad(bp, ((0, 0), (0, o_pad - O))).astype(compute_dtype)         # [NE*r, O_pad]
    # Router weights with the expert expansion folded in: column k*r+j of the
    # repeated weight equals expert-k's router column (exact replication).
    wri = jnp.repeat(params["w_ri"].T.astype(f32), r, axis=1)                # [D, NE*r]
    wrt = jnp.repeat(params["w_rt"].T.astype(f32), r, axis=1)                # [D, NE*r]
    bri = jnp.repeat(params["b_ri"].astype(f32), r, axis=1)                  # [1, NE*r]
    brt = jnp.repeat(params["b_rt"].astype(f32), r, axis=1)                  # [1, NE*r]

    # ---- pass 1: per-batch router scale [B, NE*r] (tiny, exact f32) ----
    router_kernel = functools.partial(mm_router_scale_kernel,
                                      split_loc=split_loc, inv_t=inv_t)
    scale = pl.pallas_call(
        router_kernel,
        out_shape=jax.ShapeDtypeStruct((B, ne * r), f32),
        grid_spec=pltpu.PrefetchScalarGridSpec(
            num_scalar_prefetch=0,
            grid=(B,),
            in_specs=[pl.BlockSpec((pl.Squeezed(), S, D), lambda b: (b, 0, 0))]
                     + [_resident_spec(a.shape, single_buffer_weights)
                        for a in (wri, bri, wrt, brt)],
            # Whole output stays resident; each step writes its own row
            # (revisited output -> grid axis must be "arbitrary").
            out_specs=pl.BlockSpec((B, ne * r), lambda b: (0, 0)),
        ),
        compiler_params=pltpu.CompilerParams(
            dimension_semantics=("arbitrary",)),
    )(x, wri, bri, wrt, brt)

    # ---- pass 2: M-tiled base + packed-LoRA matmuls ----
    if tile_m is None:
        tile_m = _pick_tile_m(S)
    if S % tile_m != 0 or tile_m % 8 != 0:
        raise ValueError("tile_m must be a multiple of 8 that divides S")
    num_m = S // tile_m

    weight_args = (scale, wt, bb, ap, bp)
    in_specs = ([pl.BlockSpec((pl.Squeezed(), tile_m, D), lambda b, m: (b, m, 0))]
                + [_resident_spec(a.shape, single_buffer_weights) for a in weight_args])
    out_spec = pl.BlockSpec((pl.Squeezed(), tile_m, o_pad), lambda b, m: (b, m, 0))

    # VMEM budget hint: only passed when the estimate exceeds the 16 MiB scoped
    # default (v5e) — a no-op at demo shapes.  (v7x: 64 MiB physical per TC.)
    def _nbytes(a):
        return a.size * a.dtype.itemsize
    est = (2 * sum(_nbytes(a) for a in weight_args)
           + 4 * (tile_m * D * x.dtype.itemsize + tile_m * o_pad * 4)
           + (2 << 20))
    cp_kwargs = dict(dimension_semantics=("parallel", "parallel"))
    if est > (16 << 20):
        cp_kwargs["vmem_limit_bytes"] = int(min(est, 96 << 20))

    out = pl.pallas_call(
        mm_lora_matmul_kernel,
        out_shape=jax.ShapeDtypeStruct((B, S, o_pad), x.dtype),
        grid_spec=pltpu.PrefetchScalarGridSpec(
            num_scalar_prefetch=0,
            grid=(B, num_m),
            in_specs=in_specs,
            out_specs=out_spec,
        ),
        compiler_params=pltpu.CompilerParams(**cp_kwargs),
    )(x, scale, wt, bb, ap, bp)

    return out[..., :O] if o_pad != O else out


# --------------------------------------------------------------------------
# pure-JAX reference mirroring the PyTorch forward (non-collapsed IEB)
# --------------------------------------------------------------------------
def mm_linear_reference(x, params, *, scaling, split_loc, t):
    base = jnp.einsum("bsd,od->bso", x, params["w_base"]) + params["b_base"][0]

    def lora(a, b):
        return jnp.einsum("bsr,or->bso",
                          jnp.einsum("bsd,rd->bsr", x, a), b) * scaling

    los = [lora(params[f"a{k}"], params[f"b{k}"]) for k in (1, 2, 3, 4)]
    expert = jnp.stack(los, axis=2)                         # [B, S, 4, O]

    x_img, x_text = x[:, :split_loc, :], x[:, split_loc:, :]

    def ieb(m1, m2):
        sim = jnp.einsum("bjd,bkd->bjk", m1, m2)
        return m1 + jnp.einsum("bjk,bkd->bjd", sim, m2)

    fus_i = ieb(x_img, x_text)
    fus_t = ieb(x_text, x_img)
    img_avg = jnp.mean(fus_i, axis=1)
    text_avg = jnp.mean(fus_t, axis=1)

    std_i = jnp.std(img_avg, axis=-1, ddof=1)
    std_t = jnp.std(text_avg, axis=-1, ddof=1)
    w = jax.nn.softmax(jnp.stack([std_i, std_t], axis=-1) / t, axis=-1)
    w_i, w_t = w[:, 0:1], w[:, 1:2]

    r_img = img_avg @ params["w_ri"].T + params["b_ri"][0]
    r_txt = text_avg @ params["w_rt"].T + params["b_rt"][0]
    mixed_router = r_img * w_i + r_txt * w_t                # [B, 4]

    mixed = jnp.einsum("be,bsed->bsd", mixed_router, expert)
    return base + mixed


if __name__ == "__main__":
    # Small shapes consistent with the module (split_loc = 32 is hard-coded).
    B, S = 2, 48
    IN, OUT, R, NE = 64, 96, 8, 4
    SPLIT = 32                      # multiple of 8 -> sublane-aligned IEB slices
    LORA_ALPHA = 16
    SCALING = LORA_ALPHA / R
    T = 4.0

    key = jax.random.PRNGKey(0)
    keys = jax.random.split(key, 20)

    # Deterministic synthetic parameters.
    # NOTE: the module zero-inits lora_B_* weights; we use small random values
    # so the LoRA/router path is numerically exercised (synthetic test).
    params = {
        "w_base": jax.random.normal(keys[1], (OUT, IN), jnp.float32) * 0.05,
        "b_base": jax.random.normal(keys[2], (1, OUT), jnp.float32) * 0.05,
        "a1": jax.random.normal(keys[3], (R, IN), jnp.float32) * 0.05,
        "b1": jax.random.normal(keys[4], (OUT, R), jnp.float32) * 0.05,
        "a2": jax.random.normal(keys[5], (R, IN), jnp.float32) * 0.05,
        "b2": jax.random.normal(keys[6], (OUT, R), jnp.float32) * 0.05,
        "a3": jax.random.normal(keys[7], (R, IN), jnp.float32) * 0.05,
        "b3": jax.random.normal(keys[8], (OUT, R), jnp.float32) * 0.05,
        "a4": jax.random.normal(keys[9], (R, IN), jnp.float32) * 0.05,
        "b4": jax.random.normal(keys[10], (OUT, R), jnp.float32) * 0.05,
        "w_ri": jax.random.normal(keys[11], (NE, IN), jnp.float32) * 1e-5,
        "b_ri": jax.random.normal(keys[12], (1, NE), jnp.float32) * 0.05,
        "w_rt": jax.random.normal(keys[13], (NE, IN), jnp.float32) * 1e-5,
        "b_rt": jax.random.normal(keys[14], (1, NE), jnp.float32) * 0.05,
    }

    x = jax.random.normal(keys[0], (B, S, IN), jnp.float32)

    ref = mm_linear_reference(x, params, scaling=SCALING, split_loc=SPLIT, t=T)

    def run(**kw):
        out = mm_linear_forward(x, params, scaling=SCALING, split_loc=SPLIT, t=T, **kw)
        return jax.block_until_ready(out)

    # f32 MXU path (exact parity with the f32 reference).  If this build's
    # pipeline lowering rejects single-buffered weights, fall back once.
    try:
        out = run(single_buffer_weights=True)
        sbw = True
    except Exception:
        sbw = False
        out = run(single_buffer_weights=False)
    assert out.shape == (B, S, OUT)
    assert jnp.allclose(out, ref, rtol=1e-4, atol=1e-4), \
        float(jnp.max(jnp.abs(out - ref)))

    # Explicit multi-tile M pipeline (3 seq tiles per batch, grid=(2, 3)).
    out_tiled = run(tile_m=16, single_buffer_weights=sbw)
    assert jnp.allclose(out_tiled, ref, rtol=1e-4, atol=1e-4), \
        float(jnp.max(jnp.abs(out_tiled - ref)))

    # bf16 MXU operands / f32 accumulation (throughput path, looser tolerance).
    out_bf16 = run(compute_dtype=jnp.bfloat16, single_buffer_weights=sbw)
    assert out_bf16.shape == (B, S, OUT)
    assert jnp.allclose(out_bf16, ref, rtol=3e-2, atol=3e-2), \
        float(jnp.max(jnp.abs(out_bf16 - ref)))

    print("KERNEL_OK")
</pallas_src>

<mosaic_0001>
module attributes {stable_mosaic.version = 11 : i64} {
  func.func @mm_router_scale_kernel(%arg0: i32, %arg1: memref<1x48x64xf32, #tpu.memory_space<vmem>>, %arg2: memref<64x32xf32, #tpu.memory_space<vmem>>, %arg3: memref<1x32xf32, #tpu.memory_space<vmem>>, %arg4: memref<64x32xf32, #tpu.memory_space<vmem>>, %arg5: memref<1x32xf32, #tpu.memory_space<vmem>>, %arg6: memref<2x32xf32, #tpu.memory_space<vmem>>) attributes {dimension_semantics = [#tpu.dimension_semantics<arbitrary>], iteration_bounds = array<i64: 2>, scalar_prefetch = 0 : i64, scratch_operands = 0 : i64, tpu.core_type = #tpu.core_type<tc>, window_params = [{transform_indices = @transform_0, window_bounds = array<i64: 1, 48, 64>}, {pipeline_mode = #tpu.pipeline_mode<synchronous>, transform_indices = @transform_1, window_bounds = array<i64: 64, 32>}, {pipeline_mode = #tpu.pipeline_mode<synchronous>, transform_indices = @transform_2, window_bounds = array<i64: 1, 32>}, {pipeline_mode = #tpu.pipeline_mode<synchronous>, transform_indices = @transform_3, window_bounds = array<i64: 64, 32>}, {pipeline_mode = #tpu.pipeline_mode<synchronous>, transform_indices = @transform_4, window_bounds = array<i64: 1, 32>}, {pipeline_mode = #tpu.pipeline_mode<synchronous>, transform_indices = @transform_5, window_bounds = array<i64: 2, 32>}]} {
    %c0 = arith.constant 0 : index
    %c0_0 = arith.constant 0 : index
    %c0_1 = arith.constant 0 : index
    %0 = vector.load %arg1[%c0, %c0_0, %c0_1] : memref<1x48x64xf32, #tpu.memory_space<vmem>>, vector<1x48x64xf32>
    %1 = vector.shape_cast %0 : vector<1x48x64xf32> to vector<48x64xf32>
    %2 = vector.extract_strided_slice %1 {offsets = [0, 0], sizes = [32, 64], strides = [1, 1]} : vector<48x64xf32> to vector<32x64xf32>
    %3 = vector.extract_strided_slice %1 {offsets = [32, 0], sizes = [16, 64], strides = [1, 1]} : vector<48x64xf32> to vector<16x64xf32>
    %cst = arith.constant dense<0.000000e+00> : vector<64xf32>
    %4 = vector.multi_reduction <add>, %2, %cst [0] : vector<32x64xf32> to vector<64xf32>
    %5 = vector.shape_cast %4 : vector<64xf32> to vector<1x64xf32>
    %cst_2 = arith.constant 3.200000e+01 : f32
    %6 = vector.broadcast %cst_2 : f32 to vector<1x64xf32>
    %7 = arith.divf %5, %6 : vector<1x64xf32>
    %cst_3 = arith.constant dense<0.000000e+00> : vector<64xf32>
    %8 = vector.multi_reduction <add>, %3, %cst_3 [0] : vector<16x64xf32> to vector<64xf32>
    %9 = vector.shape_cast %8 : vector<64xf32> to vector<1x64xf32>
    %cst_4 = arith.constant 1.600000e+01 : f32
    %10 = vector.broadcast %cst_4 : f32 to vector<1x64xf32>
    %11 = arith.divf %9, %10 : vector<1x64xf32>
    %cst_5 = arith.constant dense<0.000000e+00> : vector<1x16xf32>
    %12 = tpu.matmul %7, %3, %cst_5 {dimension_numbers = #tpu.dot_dimension_numbers<[1], [1], [0], [0], [0, 0, 1, 0], [], []>} : vector<1x64xf32>, vector<16x64xf32>, vector<1x16xf32> -> vector<1x16xf32>
    %cst_6 = arith.constant dense<0.000000e+00> : vector<1x64xf32>
    %13 = tpu.matmul %12, %3, %cst_6 {dimension_numbers = #tpu.dot_dimension_numbers<[1], [0], [0], [1], [0, 0, 1, 1], [], []>} : vector<1x16xf32>, vector<16x64xf32>, vector<1x64xf32> -> vector<1x64xf32>
    %14 = arith.addf %7, %13 : vector<1x64xf32>
    %cst_7 = arith.constant dense<0.000000e+00> : vector<1x32xf32>
    %15 = tpu.matmul %11, %2, %cst_7 {dimension_numbers = #tpu.dot_dimension_numbers<[1], [1], [0], [0], [0, 0, 1, 0], [], []>} : vector<1x64xf32>, vector<32x64xf32>, vector<1x32xf32> -> vector<1x32xf32>
    %cst_8 = arith.constant dense<0.000000e+00> : vector<1x64xf32>
    %16 = tpu.matmul %15, %2, %cst_8 {dimension_numbers = #tpu.dot_dimension_numbers<[1], [0], [0], [1], [0, 0, 1, 1], [], []>} : vector<1x32xf32>, vector<32x64xf32>, vector<1x64xf32> -> vector<1x64xf32>
    %17 = arith.addf %11, %16 : vector<1x64xf32>
    %cst_9 = arith.constant dense<0.000000e+00> : vector<1xf32>
    %18 = vector.multi_reduction <add>, %14, %cst_9 [1] : vector<1x64xf32> to vector<1xf32>
    %19 = vector.shape_cast %18 : vector<1xf32> to vector<1x1xf32>
    %cst_10 = arith.constant 6.400000e+01 : f32
    %20 = vector.broadcast %cst_10 : f32 to vector<1x1xf32>
    %21 = arith.divf %19, %20 : vector<1x1xf32>
    %22 = vector.broadcast %21 : vector<1x1xf32> to vector<1x64xf32>
    %23 = arith.subf %14, %22 : vector<1x64xf32>
    %24 = arith.mulf %23, %23 : vector<1x64xf32>
    %cst_11 = arith.constant dense<0.000000e+00> : vector<1xf32>
    %25 = vector.multi_reduction <add>, %24, %cst_11 [1] : vector<1x64xf32> to vector<1xf32>
    %26 = vector.shape_cast %25 : vector<1xf32> to vector<1x1xf32>
    %cst_12 = arith.constant 6.300000e+01 : f32
    %27 = vector.broadcast %cst_12 : f32 to vector<1x1xf32>
    %28 = arith.divf %26, %27 : vector<1x1xf32>
    %29 = math.sqrt %28 : vector<1x1xf32>
    %cst_13 = arith.constant dense<0.000000e+00> : vector<1xf32>
    %30 = vector.multi_reduction <add>, %17, %cst_13 [1] : vector<1x64xf32> to vector<1xf32>
    %31 = vector.shape_cast %30 : vector<1xf32> to vector<1x1xf32>
    %cst_14 = arith.constant 6.400000e+01 : f32
    %32 = vector.broadcast %cst_14 : f32 to vector<1x1xf32>
    %33 = arith.divf %31, %32 : vector<1x1xf32>
    %34 = vector.broadcast %33 : vector<1x1xf32> to vector<1x64xf32>
    %35 = arith.subf %17, %34 : vector<1x64xf32>
    %36 = arith.mulf %35, %35 : vector<1x64xf32>
    %cst_15 = arith.constant dense<0.000000e+00> : vector<1xf32>
    %37 = vector.multi_reduction <add>, %36, %cst_15 [1] : vector<1x64xf32> to vector<1xf32>
    %38 = vector.shape_cast %37 : vector<1xf32> to vector<1x1xf32>
    %cst_16 = arith.constant 6.300000e+01 : f32
    %39 = vector.broadcast %cst_16 : f32 to vector<1x1xf32>
    %40 = arith.divf %38, %39 : vector<1x1xf32>
    %41 = math.sqrt %40 : vector<1x1xf32>
    %42 = arith.maximumf %29, %41 : vector<1x1xf32>
    %43 = arith.subf %29, %42 : vector<1x1xf32>
    %cst_17 = arith.constant 2.500000e-01 : f32
    %44 = vector.broadcast %cst_17 : f32 to vector<1x1xf32>
    %45 = arith.mulf %43, %44 : vector<1x1xf32>
    %46 = math.exp %45 : vector<1x1xf32>
    %47 = arith.subf %41, %42 : vector<1x1xf32>
    %cst_18 = arith.constant 2.500000e-01 : f32
    %48 = vector.broadcast %cst_18 : f32 to vector<1x1xf32>
    %49 = arith.mulf %47, %48 : vector<1x1xf32>
    %50 = math.exp %49 : vector<1x1xf32>
    %51 = arith.addf %46, %50 : vector<1x1xf32>
    %cst_19 = arith.constant 1.000000e+00 : f32
    %52 = vector.broadcast %cst_19 : f32 to vector<1x1xf32>
    %53 = arith.divf %52, %51 : vector<1x1xf32>
    %54 = arith.mulf %46, %53 : vector<1x1xf32>
    %55 = arith.mulf %50, %53 : vector<1x1xf32>
    %c0_20 = arith.constant 0 : index
    %c0_21 = arith.constant 0 : index
    %56 = vector.load %arg2[%c0_20, %c0_21] : memref<64x32xf32, #tpu.memory_space<vmem>>, vector<64x32xf32>
    %cst_22 = arith.constant dense<0.000000e+00> : vector<1x32xf32>
    %57 = tpu.matmul %14, %56, %cst_22 {dimension_numbers = #tpu.dot_dimension_numbers<[1], [0], [0], [1], [0, 0, 1, 1], [], []>} : vector<1x64xf32>, vector<64x32xf32>, vector<1x32xf32> -> vector<1x32xf32>
    %c0_23 = arith.constant 0 : index
    %c0_24 = arith.constant 0 : index
    %58 = vector.load %arg3[%c0_23, %c0_24] : memref<1x32xf32, #tpu.memory_space<vmem>>, vector<1x32xf32>
    %59 = arith.addf %57, %58 : vector<1x32xf32>
    %c0_25 = arith.constant 0 : index
    %c0_26 = arith.constant 0 : index
    %60 = vector.load %arg4[%c0_25, %c0_26] : memref<64x32xf32, #tpu.memory_space<vmem>>, vector<64x32xf32>
    %cst_27 = arith.constant dense<0.000000e+00> : vector<1x32xf32>
    %61 = tpu.matmul %17, %60, %cst_27 {dimension_numbers = #tpu.dot_dimension_numbers<[1], [0], [0], [1], [0, 0, 1, 1], [], []>} : vector<1x64xf32>, vector<64x32xf32>, vector<1x32xf32> -> vector<1x32xf32>
    %c0_28 = arith.constant 0 : index
    %c0_29 = arith.constant 0 : index
    %62 = vector.load %arg5[%c0_28, %c0_29] : memref<1x32xf32, #tpu.memory_space<vmem>>, vector<1x32xf32>
    %63 = arith.addf %61, %62 : vector<1x32xf32>
    %64 = vector.broadcast %54 : vector<1x1xf32> to vector<1x32xf32>
    %65 = arith.mulf %59, %64 : vector<1x32xf32>
    %66 = vector.broadcast %55 : vector<1x1xf32> to vector<1x32xf32>
    %67 = arith.mulf %63, %66 : vector<1x32xf32>
    %68 = arith.addf %65, %67 : vector<1x32xf32>
    %69 = arith.index_cast %arg0 : i32 to index
    %c0_30 = arith.constant 0 : index
    %70 = vector.load %arg6[%69, %c0_30] : memref<2x32xf32, #tpu.memory_space<vmem>>, vector<1x32xf32>
    tpu.vector_store %arg6[%69, %c0_30], %68 {strides = array<i32>} : memref<2x32xf32, #tpu.memory_space<vmem>>, vector<1x32xf32>,
    return
  }
  func.func @transform_0(%arg0: i32) -> (i32, i32, i32) {
    %c0_i32 = arith.constant 0 : i32
    %c0_i32_0 = arith.constant 0 : i32
    %c0_i32_1 = arith.constant 0 : i32
    return %arg0, %c0_i32, %c0_i32_0 : i32, i32, i32
  }
  func.func @transform_1(%arg0: i32) -> (i32, i32) {
    %c0_i32 = arith.constant 0 : i32
    %c0_i32_0 = arith.constant 0 : i32
    %c0_i32_1 = arith.constant 0 : i32
    return %c0_i32, %c0_i32_0 : i32, i32
  }
  func.func @transform_2(%arg0: i32) -> (i32, i32) {
    %c0_i32 = arith.constant 0 : i32
    %c0_i32_0 = arith.constant 0 : i32
    %c0_i32_1 = arith.constant 0 : i32
    return %c0_i32, %c0_i32_0 : i32, i32
  }
  func.func @transform_3(%arg0: i32) -> (i32, i32) {
    %c0_i32 = arith.constant 0 : i32
    %c0_i32_0 = arith.constant 0 : i32
    %c0_i32_1 = arith.constant 0 : i32
    return %c0_i32, %c0_i32_0 : i32, i32
  }
  func.func @transform_4(%arg0: i32) -> (i32, i32) {
    %c0_i32 = arith.constant 0 : i32
    %c0_i32_0 = arith.constant 0 : i32
    %c0_i32_1 = arith.constant 0 : i32
    return %c0_i32, %c0_i32_0 : i32, i32
  }
  func.func @transform_5(%arg0: i32) -> (i32, i32) {
    %c0_i32 = arith.constant 0 : i32
    %c0_i32_0 = arith.constant 0 : i32
    %c0_i32_1 = arith.constant 0 : i32
    return %c0_i32, %c0_i32_0 : i32, i32
  }
}

module attributes {stable_mosaic.version = 11 : i64} {
  func.func @mm_router_scale_kernel(%arg0: i32, %arg1: memref<1x48x64xf32, #tpu.memory_space<vmem>>, %arg2: memref<64x32xf32, #tpu.memory_space<vmem>>, %arg3: memref<1x32xf32, #tpu.memory_space<vmem>>, %arg4: memref<64x32xf32, #tpu.memory_space<vmem>>, %arg5: memref<1x32xf32, #tpu.memory_space<vmem>>, %arg6: memref<2x32xf32, #tpu.memory_space<vmem>>) attributes {dimension_semantics = [#tpu.dimension_semantics<arbitrary>], iteration_bounds = array<i64: 2>, scalar_prefetch = 0 : i64, scratch_operands = 0 : i64, tpu.core_type = #tpu.core_type<tc>, window_params = [{transform_indices = @transform_0, window_bounds = array<i64: 1, 48, 64>}, {pipeline_mode = #tpu.pipeline_mode<synchronous>, transform_indices = @transform_1, window_bounds = array<i64: 64, 32>}, {pipeline_mode = #tpu.pipeline_mode<synchronous>, transform_indices = @transform_2, window_bounds = array<i64: 1, 32>}, {pipeline_mode = #tpu.pipeline_mode<synchronous>, transform_indices = @transform_3, window_bounds = array<i64: 64, 32>}, {pipeline_mode = #tpu.pipeline_mode<synchronous>, transform_indices = @transform_4, window_bounds = array<i64: 1, 32>}, {pipeline_mode = #tpu.pipeline_mode<synchronous>, transform_indices = @transform_5, window_bounds = array<i64: 2, 32>}]} {
    %c0 = arith.constant 0 : index
    %c0_0 = arith.constant 0 : index
    %c0_1 = arith.constant 0 : index
    %0 = vector.load %arg1[%c0, %c0_0, %c0_1] : memref<1x48x64xf32, #tpu.memory_space<vmem>>, vector<1x48x64xf32>
    %1 = vector.shape_cast %0 : vector<1x48x64xf32> to vector<48x64xf32>
    %2 = vector.extract_strided_slice %1 {offsets = [0, 0], sizes = [32, 64], strides = [1, 1]} : vector<48x64xf32> to vector<32x64xf32>
    %3 = vector.extract_strided_slice %1 {offsets = [32, 0], sizes = [16, 64], strides = [1, 1]} : vector<48x64xf32> to vector<16x64xf32>
    %cst = arith.constant dense<0.000000e+00> : vector<64xf32>
    %4 = vector.multi_reduction <add>, %2, %cst [0] : vector<32x64xf32> to vector<64xf32>
    %5 = vector.shape_cast %4 : vector<64xf32> to vector<1x64xf32>
    %cst_2 = arith.constant 3.200000e+01 : f32
    %6 = vector.broadcast %cst_2 : f32 to vector<1x64xf32>
    %7 = arith.divf %5, %6 : vector<1x64xf32>
    %cst_3 = arith.constant dense<0.000000e+00> : vector<64xf32>
    %8 = vector.multi_reduction <add>, %3, %cst_3 [0] : vector<16x64xf32> to vector<64xf32>
    %9 = vector.shape_cast %8 : vector<64xf32> to vector<1x64xf32>
    %cst_4 = arith.constant 1.600000e+01 : f32
    %10 = vector.broadcast %cst_4 : f32 to vector<1x64xf32>
    %11 = arith.divf %9, %10 : vector<1x64xf32>
    %cst_5 = arith.constant dense<0.000000e+00> : vector<1x16xf32>
    %12 = tpu.matmul %7, %3, %cst_5 {dimension_numbers = #tpu.dot_dimension_numbers<[1], [1], [0], [0], [0, 0, 1, 0], [], []>} : vector<1x64xf32>, vector<16x64xf32>, vector<1x16xf32> -> vector<1x16xf32>
    %cst_6 = arith.constant dense<0.000000e+00> : vector<1x64xf32>
    %13 = tpu.matmul %12, %3, %cst_6 {dimension_numbers = #tpu.dot_dimension_numbers<[1], [0], [0], [1], [0, 0, 1, 1], [], []>} : vector<1x16xf32>, vector<16x64xf32>, vector<1x64xf32> -> vector<1x64xf32>
    %14 = arith.addf %7, %13 : vector<1x64xf32>
    %cst_7 = arith.constant dense<0.000000e+00> : vector<1x32xf32>
    %15 = tpu.matmul %11, %2, %cst_7 {dimension_numbers = #tpu.dot_dimension_numbers<[1], [1], [0], [0], [0, 0, 1, 0], [], []>} : vector<1x64xf32>, vector<32x64xf32>, vector<1x32xf32> -> vector<1x32xf32>
    %cst_8 = arith.constant dense<0.000000e+00> : vector<1x64xf32>
    %16 = tpu.matmul %15, %2, %cst_8 {dimension_numbers = #tpu.dot_dimension_numbers<[1], [0], [0], [1], [0, 0, 1, 1], [], []>} : vector<1x32xf32>, vector<32x64xf32>, vector<1x64xf32> -> vector<1x64xf32>
    %17 = arith.addf %11, %16 : vector<1x64xf32>
    %cst_9 = arith.constant dense<0.000000e+00> : vector<1xf32>
    %18 = vector.multi_reduction <add>, %14, %cst_9 [1] : vector<1x64xf32> to vector<1xf32>
    %19 = vector.shape_cast %18 : vector<1xf32> to vector<1x1xf32>
    %cst_10 = arith.constant 6.400000e+01 : f32
    %20 = vector.broadcast %cst_10 : f32 to vector<1x1xf32>
    %21 = arith.divf %19, %20 : vector<1x1xf32>
    %22 = vector.broadcast %21 : vector<1x1xf32> to vector<1x64xf32>
    %23 = arith.subf %14, %22 : vector<1x64xf32>
    %24 = arith.mulf %23, %23 : vector<1x64xf32>
    %cst_11 = arith.constant dense<0.000000e+00> : vector<1xf32>
    %25 = vector.multi_reduction <add>, %24, %cst_11 [1] : vector<1x64xf32> to vector<1xf32>
    %26 = vector.shape_cast %25 : vector<1xf32> to vector<1x1xf32>
    %cst_12 = arith.constant 6.300000e+01 : f32
    %27 = vector.broadcast %cst_12 : f32 to vector<1x1xf32>
    %28 = arith.divf %26, %27 : vector<1x1xf32>
    %29 = math.sqrt %28 : vector<1x1xf32>
    %cst_13 = arith.constant dense<0.000000e+00> : vector<1xf32>
    %30 = vector.multi_reduction <add>, %17, %cst_13 [1] : vector<1x64xf32> to vector<1xf32>
    %31 = vector.shape_cast %30 : vector<1xf32> to vector<1x1xf32>
    %cst_14 = arith.constant 6.400000e+01 : f32
    %32 = vector.broadcast %cst_14 : f32 to vector<1x1xf32>
    %33 = arith.divf %31, %32 : vector<1x1xf32>
    %34 = vector.broadcast %33 : vector<1x1xf32> to vector<1x64xf32>
    %35 = arith.subf %17, %34 : vector<1x64xf32>
    %36 = arith.mulf %35, %35 : vector<1x64xf32>
    %cst_15 = arith.constant dense<0.000000e+00> : vector<1xf32>
    %37 = vector.multi_reduction <add>, %36, %cst_15 [1] : vector<1x64xf32> to vector<1xf32>
    %38 = vector.shape_cast %37 : vector<1xf32> to vector<1x1xf32>
    %cst_16 = arith.constant 6.300000e+01 : f32
    %39 = vector.broadcast %cst_16 : f32 to vector<1x1xf32>
    %40 = arith.divf %38, %39 : vector<1x1xf32>
    %41 = math.sqrt %40 : vector<1x1xf32>
    %42 = arith.maximumf %29, %41 : vector<1x1xf32>
    %43 = arith.subf %29, %42 : vector<1x1xf32>
    %cst_17 = arith.constant 2.500000e-01 : f32
    %44 = vector.broadcast %cst_17 : f32 to vector<1x1xf32>
    %45 = arith.mulf %43, %44 : vector<1x1xf32>
    %46 = math.exp %45 : vector<1x1xf32>
    %47 = arith.subf %41, %42 : vector<1x1xf32>
    %cst_18 = arith.constant 2.500000e-01 : f32
    %48 = vector.broadcast %cst_18 : f32 to vector<1x1xf32>
    %49 = arith.mulf %47, %48 : vector<1x1xf32>
    %50 = math.exp %49 : vector<1x1xf32>
    %51 = arith.addf %46, %50 : vector<1x1xf32>
    %cst_19 = arith.constant 1.000000e+00 : f32
    %52 = vector.broadcast %cst_19 : f32 to vector<1x1xf32>
    %53 = arith.divf %52, %51 : vector<1x1xf32>
    %54 = arith.mulf %46, %53 : vector<1x1xf32>
    %55 = arith.mulf %50, %53 : vector<1x1xf32>
    %c0_20 = arith.constant 0 : index
    %c0_21 = arith.constant 0 : index
    %56 = vector.load %arg2[%c0_20, %c0_21] : memref<64x32xf32, #tpu.memory_space<vmem>>, vector<64x32xf32>
    %cst_22 = arith.constant dense<0.000000e+00> : vector<1x32xf32>
    %57 = tpu.matmul %14, %56, %cst_22 {dimension_numbers = #tpu.dot_dimension_numbers<[1], [0], [0], [1], [0, 0, 1, 1], [], []>} : vector<1x64xf32>, vector<64x32xf32>, vector<1x32xf32> -> vector<1x32xf32>
    %c0_23 = arith.constant 0 : index
    %c0_24 = arith.constant 0 : index
    %58 = vector.load %arg3[%c0_23, %c0_24] : memref<1x32xf32, #tpu.memory_space<vmem>>, vector<1x32xf32>
    %59 = arith.addf %57, %58 : vector<1x32xf32>
    %c0_25 = arith.constant 0 : index
    %c0_26 = arith.constant 0 : index
    %60 = vector.load %arg4[%c0_25, %c0_26] : memref<64x32xf32, #tpu.memory_space<vmem>>, vector<64x32xf32>
    %cst_27 = arith.constant dense<0.000000e+00> : vector<1x32xf32>
    %61 = tpu.matmul %17, %60, %cst_27 {dimension_numbers = #tpu.dot_dimension_numbers<[1], [0], [0], [1], [0, 0, 1, 1], [], []>} : vector<1x64xf32>, vector<64x32xf32>, vector<1x32xf32> -> vector<1x32xf32>
    %c0_28 = arith.constant 0 : index
    %c0_29 = arith.constant 0 : index
    %62 = vector.load %arg5[%c0_28, %c0_29] : memref<1x32xf32, #tpu.memory_space<vmem>>, vector<1x32xf32>
    %63 = arith.addf %61, %62 : vector<1x32xf32>
    %64 = vector.broadcast %54 : vector<1x1xf32> to vector<1x32xf32>
    %65 = arith.mulf %59, %64 : vector<1x32xf32>
    %66 = vector.broadcast %55 : vector<1x1xf32> to vector<1x32xf32>
    %67 = arith.mulf %63, %66 : vector<1x32xf32>
    %68 = arith.addf %65, %67 : vector<1x32xf32>
    %69 = arith.index_cast %arg0 : i32 to index
    %c0_30 = arith.constant 0 : index
    %70 = vector.load %arg6[%69, %c0_30] : memref<2x32xf32, #tpu.memory_space<vmem>>, vector<1x32xf32>
    tpu.vector_store %arg6[%69, %c0_30], %68 {strides = array<i32>} : memref<2x32xf32, #tpu.memory_space<vmem>>, vector<1x32xf32>,
    return
  }
  func.func @transform_0(%arg0: i32) -> (i32, i32, i32) {
    %c0_i32 = arith.constant 0 : i32
    %c0_i32_0 = arith.constant 0 : i32
    %c0_i32_1 = arith.constant 0 : i32
    return %arg0, %c0_i32, %c0_i32_0 : i32, i32, i32
  }
  func.func @transform_1(%arg0: i32) -> (i32, i32) {
    %c0_i32 = arith.constant 0 : i32
    %c0_i32_0 = arith.constant 0 : i32
    %c0_i32_1 = arith.constant 0 : i32
    return %c0_i32, %c0_i32_0 : i32, i32
  }
  func.func @transform_2(%arg0: i32) -> (i32, i32) {
    %c0_i32 = arith.constant 0 : i32
    %c0_i32_0 = arith.constant 0 : i32
    %c0_i32_1 = arith.constant 0 : i32
    return %c0_i32, %c0_i32_0 : i32, i32
  }
  func.func @transform_3(%arg0: i32) -> (i32, i32) {
    %c0_i32 = arith.constant 0 : i32
    %c0_i32_0 = arith.constant 0 : i32
    %c0_i32_1 = arith.constant 0 : i32
    return %c0_i32, %c0_i32_0 : i32, i32
  }
  func.func @transform_4(%arg0: i32) -> (i32, i32) {
    %c0_i32 = arith.constant 0 : i32
    %c0_i32_0 = arith.constant 0 : i32
    %c0_i32_1 = arith.constant 0 : i32
    return %c0_i32, %c0_i32_0 : i32, i32
  }
  func.func @transform_5(%arg0: i32) -> (i32, i32) {
    %c0_i32 = arith.constant 0 : i32
    %c0_i32_0 = arith.constant 0 : i32
    %c0_i32_1 = arith.constant 0 : i32
    return %c0_i32, %c0_i32_0 : i32, i32
  }
}

</mosaic_0001>

<llo_original>
// kernel: tpu_custom_call.1
$region0: #{tpu_custom_call.1}
  #allocation0 [shape = 'u32[]', space=smem, size = 0x4, offset = 0x4, fixed_abs, tag = 'smem constant byte address 0x4 - core index']
  #allocation1 [shape = 'u32[144,128]{1,0:T(1,128)}', space=vmem, size = 0x12000, scoped, tag = 'internal scratch']
  %s0 = inlined_call_operand.vmem [shape: f32[2,48,64], index: 0, kind: input, shape index: {}]
  %s1 = inlined_call_operand.vmem [shape: f32[64,32], index: 1, kind: input, shape index: {}]
  %s2 = inlined_call_operand.vmem [shape: f32[1,32], index: 2, kind: input, shape index: {}]
  %s3 = inlined_call_operand.vmem [shape: f32[64,32], index: 3, kind: input, shape index: {}]
  %s4 = inlined_call_operand.vmem [shape: f32[1,32], index: 4, kind: input, shape index: {}]
  %s5 = inlined_call_operand.hbm [shape: f32[2,32], index: 5, kind: output, shape index: {}]
  %s6 = sld [smem:[#allocation0]]
  $region53: #{tpu_custom_call.1} parent=0
    _
  %s8 = ssub.s32 1, %s6
  %s9 = scalar_select 0, %s8, %s6
  $region1: #{tpu_custom_call.1} parent=0
    #allocation2 [shape = 'u8[1024]{0}', space=vmem, size = 0x400, scoped, tag = 'output window, operand 0, single buffered']
    #allocation3 [shape = 's32[2]{0}', space=sflag, size = 0x8, scoped, tag = 'scoped memory for tpu_custom_call.1']
    %10 = vsyncpa [#allocation3], 0
    loop: start=0, step=1, limit=4
    $region2: #{tpu_custom_call.1} parent=1 // loop_pre_header
      _
    $region3: #{tpu_custom_call.1} parent=1 // loop_header
      %s12 = sphi 0, %s16
      %p13 = scmp.ge.s32.totalorder %s12, 4
      %s22 = sphi 0, %s24
      %s25 = sphi 0, %s22
      %s26 = sphi 0, %s25
      %s42 = sphi 0, %s26
      %s46 = sphi 0, %s46
      %s48 = sphi 0, %s46
      %s49 = sphi 0, %s48
      %s63 = sphi 0, %s49
      %s67 = sphi 0, %s67
      %s69 = sphi 0, %s67
      %s70 = sphi 0, %s69
      %s84 = sphi 0, %s70
      %s88 = sphi 0, %s88
      %s90 = sphi 0, %s88
      %s91 = sphi 0, %s90
      %s105 = sphi 0, %s91
      %s109 = sphi 0, %s109
      %s111 = sphi 0, %s109
      %s112 = sphi 0, %s111
      %s126 = sphi 0, %s112
      %s130 = sphi 0, %s130
      %s132 = sphi 0, %s130
      %s133 = sphi 0, %s132
      %s147 = sphi 0, %s133
    $region4: #{tpu_custom_call.1} parent=1 // loop_header_branch
      %15 = sbr.rel (%p13) target = $region8
    $region5: #{tpu_custom_call.1} parent=1 // loop_body
      %s17 = ssub.s32 %s12, 1
      %s18 = ssub.s32 %s12, 2
      %s19 = sadd.s32 %s12, 1
      %s20 = ssub.s32 %s12, %s19
      %p21 = scmp.eq.s32.totalorder %s20, 0
      %s23 = sadd.s32 %s22, 1
      %s24 = scalar_select %p21, %s22, %s23
      %p27 = pneg %p21
      %p28 = scmp.eq.s32.totalorder %s12, 1
      %p29 = por %p27, %p28
      %p30 = scmp.ne.s32.totalorder %s22, %s25
      %p31 = scmp.eq.s32.totalorder %s12, 0
      %p32 = por %p30, %p31
      %p33 = scmp.ne.s32.totalorder %s22, %s25
      %p34 = scmp.eq.s32.totalorder %s17, 1
      %p35 = por %p33, %p34
      %p36 = scmp.ne.s32.totalorder %s25, %s26
      %p37 = scmp.eq.s32.totalorder %s17, 0
      %p38 = por %p36, %p37
      %p39 = scmp.ne.s32.totalorder %s25, %s26
      %p40 = scmp.eq.s32.totalorder %s18, 1
      %p41 = por %p39, %p40
      %p43 = scmp.ne.s32.totalorder %s26, %s42
      %p44 = scmp.eq.s32.totalorder %s18, 0
      %p45 = por %p43, %p44
      %s47 = sadd.s32 %s46, 1
      %p50 = scmp.eq.s32.totalorder %s12, 1
      %p51 = scmp.ne.s32.totalorder %s46, %s48
      %p52 = scmp.eq.s32.totalorder %s12, 0
      %p53 = por %p51, %p52
      %p54 = scmp.ne.s32.totalorder %s46, %s48
      %p55 = scmp.eq.s32.totalorder %s17, 1
      %p56 = por %p54, %p55
      %p57 = scmp.ne.s32.totalorder %s48, %s49
      %p58 = scmp.eq.s32.totalorder %s17, 0
      %p59 = por %p57, %p58
      %p60 = scmp.ne.s32.totalorder %s48, %s49
      %p61 = scmp.eq.s32.totalorder %s18, 1
      %p62 = por %p60, %p61
      %p64 = scmp.ne.s32.totalorder %s49, %s63
      %p65 = scmp.eq.s32.totalorder %s18, 0
      %p66 = por %p64, %p65
      %s68 = sadd.s32 %s67, 1
      %p71 = scmp.eq.s32.totalorder %s12, 1
      %p72 = scmp.ne.s32.totalorder %s67, %s69
      %p73 = scmp.eq.s32.totalorder %s12, 0
      %p74 = por %p72, %p73
      %p75 = scmp.ne.s32.totalorder %s67, %s69
      %p76 = scmp.eq.s32.totalorder %s17, 1
      %p77 = por %p75, %p76
      %p78 = scmp.ne.s32.totalorder %s69, %s70
      %p79 = scmp.eq.s32.totalorder %s17, 0
      %p80 = por %p78, %p79
      %p81 = scmp.ne.s32.totalorder %s69, %s70
      %p82 = scmp.eq.s32.totalorder %s18, 1
      %p83 = por %p81, %p82
      %p85 = scmp.ne.s32.totalorder %s70, %s84
      %p86 = scmp.eq.s32.totalorder %s18, 0
      %p87 = por %p85, %p86
      %s89 = sadd.s32 %s88, 1
      %p92 = scmp.eq.s32.totalorder %s12, 1
      %p93 = scmp.ne.s32.totalorder %s88, %s90
      %p94 = scmp.eq.s32.totalorder %s12, 0
      %p95 = por %p93, %p94
      %p96 = scmp.ne.s32.totalorder %s88, %s90
      %p97 = scmp.eq.s32.totalorder %s17, 1
      %p98 = por %p96, %p97
      %p99 = scmp.ne.s32.totalorder %s90, %s91
      %p100 = scmp.eq.s32.totalorder %s17, 0
      %p101 = por %p99, %p100
      %p102 = scmp.ne.s32.totalorder %s90, %s91
      %p103 = scmp.eq.s32.totalorder %s18, 1
      %p104 = por %p102, %p103
      %p106 = scmp.ne.s32.totalorder %s91, %s105
      %p107 = scmp.eq.s32.totalorder %s18, 0
      %p108 = por %p106, %p107
      %s110 = sadd.s32 %s109, 1
      %p113 = scmp.eq.s32.totalorder %s12, 1
      %p114 = scmp.ne.s32.totalorder %s109, %s111
      %p115 = scmp.eq.s32.totalorder %s12, 0
      %p116 = por %p114, %p115
      %p117 = scmp.ne.s32.totalorder %s109, %s111
      %p118 = scmp.eq.s32.totalorder %s17, 1
      %p119 = por %p117, %p118
      %p120 = scmp.ne.s32.totalorder %s111, %s112
      %p121 = scmp.eq.s32.totalorder %s17, 0
      %p122 = por %p120, %p121
      %p123 = scmp.ne.s32.totalorder %s111, %s112
      %p124 = scmp.eq.s32.totalorder %s18, 1
      %p125 = por %p123, %p124
      %p127 = scmp.ne.s32.totalorder %s112, %s126
      %p128 = scmp.eq.s32.totalorder %s18, 0
      %p129 = por %p127, %p128
      %s131 = sadd.s32 %s130, 1
      %p134 = scmp.eq.s32.totalorder %s12, 1
      %p135 = scmp.ne.s32.totalorder %s130, %s132
      %p136 = scmp.eq.s32.totalorder %s12, 0
      %p137 = por %p135, %p136
      %p138 = scmp.ne.s32.totalorder %s130, %s132
      %p139 = scmp.eq.s32.totalorder %s17, 1
      %p140 = por %p138, %p139
      %p141 = scmp.ne.s32.totalorder %s132, %s133
      %p142 = scmp.eq.s32.totalorder %s17, 0
      %p143 = por %p141, %p142
      %p144 = scmp.ne.s32.totalorder %s132, %s133
      %p145 = scmp.eq.s32.totalorder %s18, 1
      %p146 = por %p144, %p145
      %p148 = scmp.ne.s32.totalorder %s133, %s147
      %p149 = scmp.eq.s32.totalorder %s18, 0
      %p150 = por %p148, %p149
      %p151 = scmp.le.s32.totalorder 1, %s12
      %p152 = scmp.lt.s32.totalorder %s12, 3
      %p153 = pnand %p151, %p152
      %p154 = pneg %p153
      // Predicated region
      $region9: #{tpu_custom_call.1} parent=5 // pred_check
        _
      $region10: #{tpu_custom_call.1} parent=5 // pred_check_branch
        %156 = sbr.rel (%p153) target = $region12
      $region11: #{tpu_custom_call.1} parent=5 // pred_region
        %s157 = ssub.s32 %s12, 1
        // Predicated region
        $region13: #{tpu_custom_call.1} parent=11 // pred_check
          %p158 = pneg %p59
        $region14: #{tpu_custom_call.1} parent=11 // pred_check_branch
          %160 = sbr.rel (%p158) target = $region16
        $region15: #{tpu_custom_call.1} parent=11 // pred_region
          _
        $region16: #{tpu_custom_call.1} parent=11 // pred_fallthru
          _
        // Predicated region
        $region17: #{tpu_custom_call.1} parent=11 // pred_check
          %p161 = pneg %p80
        $region18: #{tpu_custom_call.1} parent=11 // pred_check_branch
          %163 = sbr.rel (%p161) target = $region20
        $region19: #{tpu_custom_call.1} parent=11 // pred_region
          _
        $region20: #{tpu_custom_call.1} parent=11 // pred_fallthru
          _
        // Predicated region
        $region21: #{tpu_custom_call.1} parent=11 // pred_check
          %p164 = pneg %p101
        $region22: #{tpu_custom_call.1} parent=11 // pred_check_branch
          %166 = sbr.rel (%p164) target = $region24
        $region23: #{tpu_custom_call.1} parent=11 // pred_region
          _
        $region24: #{tpu_custom_call.1} parent=11 // pred_fallthru
          _
        // Predicated region
        $region25: #{tpu_custom_call.1} parent=11 // pred_check
          %p167 = pneg %p122
        $region26: #{tpu_custom_call.1} parent=11 // pred_check_branch
          %169 = sbr.rel (%p167) target = $region28
        $region27: #{tpu_custom_call.1} parent=11 // pred_region
          _
        $region28: #{tpu_custom_call.1} parent=11 // pred_fallthru
          _
      $region12: #{tpu_custom_call.1} parent=5 // pred_fallthru
        _
      %p170 = scmp.lt.s32.totalorder %s12, 2
      // Predicated region
      $region29: #{tpu_custom_call.1} parent=5 // pred_check
        %p171 = pneg %p170
      $region30: #{tpu_custom_call.1} parent=5 // pred_check_branch
        %173 = sbr.rel (%p171) target = $region32
      $region31: #{tpu_custom_call.1} parent=5 // pred_region
        // Predicated region
        $region33: #{tpu_custom_call.1} parent=31 // pred_check
          %p174 = pneg %p32
        $region34: #{tpu_custom_call.1} parent=31 // pred_check_branch
          %176 = sbr.rel (%p174) target = $region36
        $region35: #{tpu_custom_call.1} parent=31 // pred_region
          %p177 = scmp.lt.s32.totalorder %s12, 1
          %s178 = scalar_select %p177, %s12, 1
          %s179 = smul.addr %s178, 6
          %s180 = smul.addr %s179, 8
          %s181 = scalar_lea.vmem %s0, %s180
        $region36: #{tpu_custom_call.1} parent=31 // pred_fallthru
          _
      $region32: #{tpu_custom_call.1} parent=5 // pred_fallthru
        _
      %p182 = scmp.le.s32.totalorder 1, %s12
      %p183 = scmp.lt.s32.totalorder %s12, 3
      %p184 = pnand %p182, %p183
      %p185 = pneg %p184
      // Predicated region
      $region37: #{tpu_custom_call.1} parent=5 // pred_check
        _
      $region38: #{tpu_custom_call.1} parent=5 // pred_check_branch
        %187 = sbr.rel (%p184) target = $region40
      $region39: #{tpu_custom_call.1} parent=5 // pred_region
        %s188 = ssub.s32 %s12, 1
        %p189 = scmp.lt.s32.totalorder %s17, 1
        %s190 = scalar_select %p189, %s17, 1
        %s191 = smul.addr %s190, 6
        %s192 = smul.addr %s191, 8
        %s193 = scalar_lea.vmem %s0, %s192
        %p194 = pneg %p38
        %p195 = pneg %p35
        %p196 = pneg %p59
        %p197 = pneg %p56
        %p198 = pneg %p80
        %p199 = pneg %p77
        %p200 = pneg %p101
        %p201 = pneg %p98
        %p202 = pneg %p122
        %p203 = pneg %p119
        %p204 = pneg %p143
        %p205 = pneg %p140
        %p206 = scmp.lt.s32.totalorder %s17, 1
        %s207 = scalar_select %p206, %s17, 1
        %s208 = smul.addr %s207, 6
        %s209 = smul.addr %s208, 8
        %s210 = scalar_lea.vmem %s0, %s209
        %v211 = vld [vmem:[%s210] sm:$0xff]
        %v212 = vld [vmem:[%s210 + $0x8] sm:$0xff]
        %v213 = vld [vmem:[%s210 + $0x10] sm:$0xff]
        %v214 = vld [vmem:[%s210 + $0x18] sm:$0xff]
        %v215 = vld [vmem:[%s210 + $0x20] sm:$0xff]
        %v216 = vld [vmem:[%s210 + $0x28] sm:$0xff]
        %vm217 = vcmask 523264
        %v218 = vsel %vm217, %v211, 0.0
        %v219 = vsel %vm217, %v212, 0.0
        %v220 = vadd.f32 %v218, %v219
        %v221 = vsel %vm217, %v213, 0.0
        %v222 = vadd.f32 %v220, %v221
        %v223 = vsel %vm217, %v214, 0.0
        %v224 = vadd.f32 %v222, %v223
        %v225 = vrot.slane %v224, 4
        %v226 = vadd.f32 %v224, %v225
        %v227 = vrot.slane %v226, 2
        %v228 = vadd.f32 %v226, %v227
        %v229 = vrot.slane %v228, 1
        %v230 = vadd.f32 %v228, %v229
        %v231 = vrcp.pop 32.0
        %v232 = vmul.f32 %v230, %v231
        %v233 = vsel %vm217, %v215, 0.0
        %v234 = vsel %vm217, %v216, 0.0
        %v235 = vadd.f32 %v233, %v234
        %v236 = vrot.slane %v235, 4
        %v237 = vadd.f32 %v235, %v236
        %v238 = vrot.slane %v237, 2
        %v239 = vadd.f32 %v237, %v238
        %v240 = vrot.slane %v239, 1
        %v241 = vadd.f32 %v239, %v240
        %v242 = vrcp.pop 16.0
        %v243 = vmul.f32 %v241, %v242
        %v245 = vsel %vm217, %v232, 0
        %v248 = vsel %vm217, %v215, 0
        %v251 = vsel %vm217, %v216, 0
        %253 = vmatprep.subr.mxu0 0.0
        %254 = vmatpush1.xpose.msra.mxu0 %v248
        %255 = vmatprep.subr.mxu0 0.0
        %256 = vmatpush1.xpose.msra.mxu0 %v251
        %257 = vmatprep.subr.mxu0 0.0
        %258 = vmatpush1.xpose.msra.mxu0 0.0
        %259 = vmatprep.subr.mxu0 0.0
        %260 = vmatpush1.xpose.msra.mxu0 0.0
        %261 = vmatprep.subr.mxu0 0.0
        %262 = vmatpush1.xpose.msra.mxu0 0.0
        %263 = vmatprep.subr.mxu0 0.0
        %264 = vmatpush1.xpose.msra.mxu0 0.0
        %265 = vmatprep.subr.mxu0 0.0
        %266 = vmatpush1.xpose.msra.mxu0 0.0
        %267 = vmatprep.subr.mxu0 0.0
        %268 = vmatpush1.xpose.msra.mxu0 0.0
        %269 = vmatprep.subr.mxu0 0.0
        %270 = vmatpush1.xpose.msra.mxu0 0.0
        %271 = vmatprep.subr.mxu0 0.0
        %272 = vmatpush1.xpose.msra.mxu0 0.0
        %273 = vmatprep.subr.mxu0 0.0
        %274 = vmatpush1.xpose.msra.mxu0 0.0
        %275 = vmatprep.subr.mxu0 0.0
        %276 = vmatpush1.xpose.msra.mxu0 0.0
        %277 = vmatprep.subr.mxu0 0.0
        %278 = vmatpush1.xpose.msra.mxu0 0.0
        %279 = vmatprep.subr.mxu0 0.0
        %280 = vmatpush1.xpose.msra.mxu0 0.0
        %281 = vmatprep.subr.mxu0 0.0
        %282 = vmatpush1.xpose.msra.mxu0 0.0
        %283 = vmatprep.subr.mxu0 0.0
        %284 = vmatpush1.xpose.msra.mxu0 0.0
        %285 = vmatprep.subr.mxu0 0.0
        %286 = vmatpush1.xpose.msra.mxu0 0.0
        %287 = vmatprep.subr.mxu0 0.0
        %288 = vmatpush1.xpose.msra.mxu0 0.0
        %289 = vmatprep.subr.mxu0 0.0
        %290 = vmatpush1.xpose.msra.mxu0 0.0
        %291 = vmatprep.subr.mxu0 0.0
        %292 = vmatpush1.xpose.msra.mxu0 0.0
        %293 = vmatprep.subr.mxu0 0.0
        %294 = vmatpush1.xpose.msra.mxu0 0.0
        %295 = vmatprep.subr.mxu0 0.0
        %296 = vmatpush1.xpose.msra.mxu0 0.0
        %297 = vmatprep.subr.mxu0 0.0
        %298 = vmatpush1.xpose.msra.mxu0 0.0
        %299 = vmatprep.subr.mxu0 0.0
        %300 = vmatpush1.xpose.msra.mxu0 0.0
        %301 = vmatprep.subr.mxu0 0.0
        %302 = vmatpush1.xpose.msra.mxu0 0.0
        %303 = vmatprep.subr.mxu0 0.0
        %304 = vmatpush1.xpose.msra.mxu0 0.0
        %305 = vmatprep.subr.mxu0 0.0
        %306 = vmatpush1.xpose.msra.mxu0 0.0
        %307 = vmatprep.subr.mxu0 0.0
        %308 = vmatpush1.xpose.msra.mxu0 0.0
        %309 = vmatprep.subr.mxu0 0.0
        %310 = vmatpush1.xpose.msra.mxu0 0.0
        %311 = vmatprep.subr.mxu0 0.0
        %312 = vmatpush1.xpose.msra.mxu0 0.0
        %313 = vmatprep.subr.mxu0 0.0
        %314 = vmatpush1.xpose.msra.mxu0 0.0
        %315 = vmatprep.subr.mxu0 0.0
        %316 = vmatpush1.xpose.msra.mxu0 0.0
        %317 = vmatprep.mubr.f32.mxu0 0.0
        %318 = vmatmul.mubr.f32.gmra.mrb[0].mxu0 %v245
        %v319 = vpop.f32.mrb[0].mxu0
        %v320 = vadd.f32 0.0, %v319
        %v321 = vpop.f32.mrb[0].mxu0
        %322 = vdwg.mxu0
        %vm323 = vcmask 130048
        %v325 = vsel %vm323, %v320, 0
        %327 = vmatprep.subr.mxu0 0.0
        %328 = vmatpush1.msra.mxu0 %v215
        %329 = vmatprep.subr.mxu0 0.0
        %330 = vmatpush1.msra.mxu0 %v216
        %331 = vmatprep.subr.mxu0 0.0
        %332 = vmatpush1.msra.mxu0 0.0
        %333 = vmatprep.subr.mxu0 0.0
        %334 = vmatpush1.msra.mxu0 0.0
        %335 = vmatprep.subr.mxu0 0.0
        %336 = vmatpush1.msra.mxu0 0.0
        %337 = vmatprep.subr.mxu0 0.0
        %338 = vmatpush1.msra.mxu0 0.0
        %339 = vmatprep.subr.mxu0 0.0
        %340 = vmatpush1.msra.mxu0 0.0
        %341 = vmatprep.subr.mxu0 0.0
        %342 = vmatpush1.msra.mxu0 0.0
        %343 = vmatprep.subr.mxu0 0.0
        %344 = vmatpush1.msra.mxu0 0.0
        %345 = vmatprep.subr.mxu0 0.0
        %346 = vmatpush1.msra.mxu0 0.0
        %347 = vmatprep.subr.mxu0 0.0
        %348 = vmatpush1.msra.mxu0 0.0
        %349 = vmatprep.subr.mxu0 0.0
        %350 = vmatpush1.msra.mxu0 0.0
        %351 = vmatprep.subr.mxu0 0.0
        %352 = vmatpush1.msra.mxu0 0.0
        %353 = vmatprep.subr.mxu0 0.0
        %354 = vmatpush1.msra.mxu0 0.0
        %355 = vmatprep.subr.mxu0 0.0
        %356 = vmatpush1.msra.mxu0 0.0
        %357 = vmatprep.subr.mxu0 0.0
        %358 = vmatpush1.msra.mxu0 0.0
        %359 = vmatprep.subr.mxu0 0.0
        %360 = vmatpush1.msra.mxu0 0.0
        %361 = vmatprep.subr.mxu0 0.0
        %362 = vmatpush1.msra.mxu0 0.0
        %363 = vmatprep.subr.mxu0 0.0
        %364 = vmatpush1.msra.mxu0 0.0
        %365 = vmatprep.subr.mxu0 0.0
        %366 = vmatpush1.msra.mxu0 0.0
        %367 = vmatprep.subr.mxu0 0.0
        %368 = vmatpush1.msra.mxu0 0.0
        %369 = vmatprep.subr.mxu0 0.0
        %370 = vmatpush1.msra.mxu0 0.0
        %371 = vmatprep.subr.mxu0 0.0
        %372 = vmatpush1.msra.mxu0 0.0
        %373 = vmatprep.subr.mxu0 0.0
        %374 = vmatpush1.msra.mxu0 0.0
        %375 = vmatprep.subr.mxu0 0.0
        %376 = vmatpush1.msra.mxu0 0.0
        %377 = vmatprep.subr.mxu0 0.0
        %378 = vmatpush1.msra.mxu0 0.0
        %379 = vmatprep.subr.mxu0 0.0
        %380 = vmatpush1.msra.mxu0 0.0
        %381 = vmatprep.subr.mxu0 0.0
        %382 = vmatpush1.msra.mxu0 0.0
        %383 = vmatprep.subr.mxu0 0.0
        %384 = vmatpush1.msra.mxu0 0.0
        %385 = vmatprep.subr.mxu0 0.0
        %386 = vmatpush1.msra.mxu0 0.0
        %387 = vmatprep.subr.mxu0 0.0
        %388 = vmatpush1.msra.mxu0 0.0
        %389 = vmatprep.subr.mxu0 0.0
        %390 = vmatpush1.msra.mxu0 0.0
        %391 = vmatprep.mubr.f32.mxu0 0.0
        %392 = vmatmul.mubr.f32.gmra.mrb[0].mxu0 %v325
        %v393 = vpop.f32.mrb[0].mxu0
        %v394 = vadd.f32 0.0, %v393
        %v395 = vpop.f32.mrb[0].mxu0
        %396 = vdwg.mxu0
        %v397 = vadd.f32 %v232, %v394
        %v399 = vsel %vm217, %v243, 0
        %v402 = vsel %vm217, %v211, 0
        %v405 = vsel %vm217, %v212, 0
        %v408 = vsel %vm217, %v213, 0
        %v411 = vsel %vm217, %v214, 0
        %413 = vmatprep.subr.mxu0 0.0
        %414 = vmatpush1.xpose.msra.mxu0 %v402
        %415 = vmatprep.subr.mxu0 0.0
        %416 = vmatpush1.xpose.msra.mxu0 %v405
        %417 = vmatprep.subr.mxu0 0.0
        %418 = vmatpush1.xpose.msra.mxu0 %v408
        %419 = vmatprep.subr.mxu0 0.0
        %420 = vmatpush1.xpose.msra.mxu0 %v411
        %421 = vmatprep.subr.mxu0 0.0
        %422 = vmatpush1.xpose.msra.mxu0 0.0
        %423 = vmatprep.subr.mxu0 0.0
        %424 = vmatpush1.xpose.msra.mxu0 0.0
        %425 = vmatprep.subr.mxu0 0.0
        %426 = vmatpush1.xpose.msra.mxu0 0.0
        %427 = vmatprep.subr.mxu0 0.0
        %428 = vmatpush1.xpose.msra.mxu0 0.0
        %429 = vmatprep.subr.mxu0 0.0
        %430 = vmatpush1.xpose.msra.mxu0 0.0
        %431 = vmatprep.subr.mxu0 0.0
        %432 = vmatpush1.xpose.msra.mxu0 0.0
        %433 = vmatprep.subr.mxu0 0.0
        %434 = vmatpush1.xpose.msra.mxu0 0.0
        %435 = vmatprep.subr.mxu0 0.0
        %436 = vmatpush1.xpose.msra.mxu0 0.0
        %437 = vmatprep.subr.mxu0 0.0
        %438 = vmatpush1.xpose.msra.mxu0 0.0
        %439 = vmatprep.subr.mxu0 0.0
        %440 = vmatpush1.xpose.msra.mxu0 0.0
        %441 = vmatprep.subr.mxu0 0.0
        %442 = vmatpush1.xpose.msra.mxu0 0.0
        %443 = vmatprep.subr.mxu0 0.0
        %444 = vmatpush1.xpose.msra.mxu0 0.0
        %445 = vmatprep.subr.mxu0 0.0
        %446 = vmatpush1.xpose.msra.mxu0 0.0
        %447 = vmatprep.subr.mxu0 0.0
        %448 = vmatpush1.xpose.msra.mxu0 0.0
        %449 = vmatprep.subr.mxu0 0.0
        %450 = vmatpush1.xpose.msra.mxu0 0.0
        %451 = vmatprep.subr.mxu0 0.0
        %452 = vmatpush1.xpose.msra.mxu0 0.0
        %453 = vmatprep.subr.mxu0 0.0
        %454 = vmatpush1.xpose.msra.mxu0 0.0
        %455 = vmatprep.subr.mxu0 0.0
        %456 = vmatpush1.xpose.msra.mxu0 0.0
        %457 = vmatprep.subr.mxu0 0.0
        %458 = vmatpush1.xpose.msra.mxu0 0.0
        %459 = vmatprep.subr.mxu0 0.0
        %460 = vmatpush1.xpose.msra.mxu0 0.0
        %461 = vmatprep.subr.mxu0 0.0
        %462 = vmatpush1.xpose.msra.mxu0 0.0
        %463 = vmatprep.subr.mxu0 0.0
        %464 = vmatpush1.xpose.msra.mxu0 0.0
        %465 = vmatprep.subr.mxu0 0.0
        %466 = vmatpush1.xpose.msra.mxu0 0.0
        %467 = vmatprep.subr.mxu0 0.0
        %468 = vmatpush1.xpose.msra.mxu0 0.0
        %469 = vmatprep.subr.mxu0 0.0
        %470 = vmatpush1.xpose.msra.mxu0 0.0
        %471 = vmatprep.subr.mxu0 0.0
        %472 = vmatpush1.xpose.msra.mxu0 0.0
        %473 = vmatprep.subr.mxu0 0.0
        %474 = vmatpush1.xpose.msra.mxu0 0.0
        %475 = vmatprep.subr.mxu0 0.0
        %476 = vmatpush1.xpose.msra.mxu0 0.0
        %477 = vmatprep.mubr.f32.mxu0 0.0
        %478 = vmatmul.mubr.f32.gmra.mrb[0].mxu0 %v399
        %v479 = vpop.f32.mrb[0].mxu0
        %v480 = vadd.f32 0.0, %v479
        %v481 = vpop.f32.mrb[0].mxu0
        %482 = vdwg.mxu0
        %vm483 = vcmask 261120
        %v485 = vsel %vm483, %v480, 0
        %487 = vmatprep.subr.mxu0 0.0
        %488 = vmatpush1.msra.mxu0 %v211
        %489 = vmatprep.subr.mxu0 0.0
        %490 = vmatpush1.msra.mxu0 %v212
        %491 = vmatprep.subr.mxu0 0.0
        %492 = vmatpush1.msra.mxu0 %v213
        %493 = vmatprep.subr.mxu0 0.0
        %494 = vmatpush1.msra.mxu0 %v214
        %495 = vmatprep.subr.mxu0 0.0
        %496 = vmatpush1.msra.mxu0 0.0
        %497 = vmatprep.subr.mxu0 0.0
        %498 = vmatpush1.msra.mxu0 0.0
        %499 = vmatprep.subr.mxu0 0.0
        %500 = vmatpush1.msra.mxu0 0.0
        %501 = vmatprep.subr.mxu0 0.0
        %502 = vmatpush1.msra.mxu0 0.0
        %503 = vmatprep.subr.mxu0 0.0
        %504 = vmatpush1.msra.mxu0 0.0
        %505 = vmatprep.subr.mxu0 0.0
        %506 = vmatpush1.msra.mxu0 0.0
        %507 = vmatprep.subr.mxu0 0.0
        %508 = vmatpush1.msra.mxu0 0.0
        %509 = vmatprep.subr.mxu0 0.0
        %510 = vmatpush1.msra.mxu0 0.0
        %511 = vmatprep.subr.mxu0 0.0
        %512 = vmatpush1.msra.mxu0 0.0
        %513 = vmatprep.subr.mxu0 0.0
        %514 = vmatpush1.msra.mxu0 0.0
        %515 = vmatprep.subr.mxu0 0.0
        %516 = vmatpush1.msra.mxu0 0.0
        %517 = vmatprep.subr.mxu0 0.0
        %518 = vmatpush1.msra.mxu0 0.0
        %519 = vmatprep.subr.mxu0 0.0
        %520 = vmatpush1.msra.mxu0 0.0
        %521 = vmatprep.subr.mxu0 0.0
        %522 = vmatpush1.msra.mxu0 0.0
        %523 = vmatprep.subr.mxu0 0.0
        %524 = vmatpush1.msra.mxu0 0.0
        %525 = vmatprep.subr.mxu0 0.0
        %526 = vmatpush1.msra.mxu0 0.0
        %527 = vmatprep.subr.mxu0 0.0
        %528 = vmatpush1.msra.mxu0 0.0
        %529 = vmatprep.subr.mxu0 0.0
        %530 = vmatpush1.msra.mxu0 0.0
        %531 = vmatprep.subr.mxu0 0.0
        %532 = vmatpush1.msra.mxu0 0.0
        %533 = vmatprep.subr.mxu0 0.0
        %534 = vmatpush1.msra.mxu0 0.0
        %535 = vmatprep.subr.mxu0 0.0
        %536 = vmatpush1.msra.mxu0 0.0
        %537 = vmatprep.subr.mxu0 0.0
        %538 = vmatpush1.msra.mxu0 0.0
        %539 = vmatprep.subr.mxu0 0.0
        %540 = vmatpush1.msra.mxu0 0.0
        %541 = vmatprep.subr.mxu0 0.0
        %542 = vmatpush1.msra.mxu0 0.0
        %543 = vmatprep.subr.mxu0 0.0
        %544 = vmatpush1.msra.mxu0 0.0
        %545 = vmatprep.subr.mxu0 0.0
        %546 = vmatpush1.msra.mxu0 0.0
        %547 = vmatprep.subr.mxu0 0.0
        %548 = vmatpush1.msra.mxu0 0.0
        %549 = vmatprep.subr.mxu0 0.0
        %550 = vmatpush1.msra.mxu0 0.0
        %551 = vmatprep.mubr.f32.mxu0 0.0
        %552 = vmatmul.mubr.f32.gmra.mrb[0].mxu0 %v485
        %v553 = vpop.f32.mrb[0].mxu0
        %v554 = vadd.f32 0.0, %v553
        %v555 = vpop.f32.mrb[0].mxu0
        %556 = vdwg.mxu0
        %v557 = vadd.f32 %v243, %v554
        %vm558 = vcmask 516096
        %v559 = vsel %vm558, %v397, 0.0
        %560 = vadd.xlane.f32.xlu0 %v559
        %v561 = vpop.xlane.xlu0 %560
        %v562 = vrcp.pop 64.0
        %v563 = vmul.f32 %v561, %v562
        %v564 = vsub.f32 %v397, %v563
        %v565 = vmul.f32 %v564, %v564
        %v566 = vsel %vm558, %v565, 0.0
        %567 = vadd.xlane.f32.xlu0 %v566
        %v568 = vpop.xlane.xlu0 %567
        %v569 = vrcp.pop 63.0
        %v570 = vmul.f32 %v568, %v569
        %v571 = vrsqrt.pop %v570
        %v572 = vmul.f32 %v570, %v571
        %vm573 = vcmp.eq.f32.partialorder %v570, inf
        %v574 = vsel %vm573, %v570, %v572
        %vm575 = vcmp.eq.f32.partialorder %v570, 0.0
        %v576 = vand.u32 %v570, 2147483648
        %v577 = vsel %vm575, %v576, %v574
        %v578 = vsel %vm558, %v557, 0.0
        %579 = vadd.xlane.f32.xlu0 %v578
        %v580 = vpop.xlane.xlu0 %579
        %v581 = vmul.f32 %v580, %v562
        %v582 = vsub.f32 %v557, %v581
        %v583 = vmul.f32 %v582, %v582
        %v584 = vsel %vm558, %v583, 0.0
        %585 = vadd.xlane.f32.xlu0 %v584
        %v586 = vpop.xlane.xlu0 %585
        %v587 = vmul.f32 %v586, %v569
        %v588 = vrsqrt.pop %v587
        %v589 = vmul.f32 %v587, %v588
        %vm590 = vcmp.eq.f32.partialorder %v587, inf
        %v591 = vsel %vm590, %v587, %v589
        %vm592 = vcmp.eq.f32.partialorder %v587, 0.0
        %v593 = vand.u32 %v587, 2147483648
        %v594 = vsel %vm592, %v593, %v591
        %v595 = vmax.f32 %v577, %v594
        %v596 = vsub.f32 %v577, %v595
        %v597 = vmul.f32 %v596, 0.25
        %v598 = vmul.f32 %v597, 1.442695
        %v599 = vpow.pop %v598
        %v600 = vsub.f32 %v594, %v595
        %v601 = vmul.f32 %v600, 0.25
        %v602 = vmul.f32 %v601, 1.442695
        %v603 = vpow.pop %v602
        %v604 = vadd.f32 %v599, %v603
        %v605 = vrcp.pop %v604
        %v606 = vmul.f32 1.0, %v605
        %v607 = vmul.f32 %v599, %v606
        %v608 = vmul.f32 %v603, %v606
        %v609 = vld [vmem:[%s1] sm:$0xff]
        %v610 = vld [vmem:[%s1 + $0x8] sm:$0xff]
        %v611 = vld [vmem:[%s1 + $0x10] sm:$0xff]
        %v612 = vld [vmem:[%s1 + $0x18] sm:$0xff]
        %v613 = vld [vmem:[%s1 + $0x20] sm:$0xff]
        %v614 = vld [vmem:[%s1 + $0x28] sm:$0xff]
        %v615 = vld [vmem:[%s1 + $0x30] sm:$0xff]
        %v616 = vld [vmem:[%s1 + $0x38] sm:$0xff]
        %v617 = vld [vmem:[%s2] sm:$0x1]
        %v619 = vsel %vm217, %v397, 0
        %621 = vmatprep.subr.mxu0 0.0
        %622 = vmatpush1.msra.mxu0 %v609
        %623 = vmatprep.subr.mxu0 0.0
        %624 = vmatpush1.msra.mxu0 %v610
        %625 = vmatprep.subr.mxu0 0.0
        %626 = vmatpush1.msra.mxu0 %v611
        %627 = vmatprep.subr.mxu0 0.0
        %628 = vmatpush1.msra.mxu0 %v612
        %629 = vmatprep.subr.mxu0 0.0
        %630 = vmatpush1.msra.mxu0 %v613
        %631 = vmatprep.subr.mxu0 0.0
        %632 = vmatpush1.msra.mxu0 %v614
        %633 = vmatprep.subr.mxu0 0.0
        %634 = vmatpush1.msra.mxu0 %v615
        %635 = vmatprep.subr.mxu0 0.0
        %636 = vmatpush1.msra.mxu0 %v616
        %637 = vmatprep.subr.mxu0 0.0
        %638 = vmatpush1.msra.mxu0 0.0
        %639 = vmatprep.subr.mxu0 0.0
        %640 = vmatpush1.msra.mxu0 0.0
        %641 = vmatprep.subr.mxu0 0.0
        %642 = vmatpush1.msra.mxu0 0.0
        %643 = vmatprep.subr.mxu0 0.0
        %644 = vmatpush1.msra.mxu0 0.0
        %645 = vmatprep.subr.mxu0 0.0
        %646 = vmatpush1.msra.mxu0 0.0
        %647 = vmatprep.subr.mxu0 0.0
        %648 = vmatpush1.msra.mxu0 0.0
        %649 = vmatprep.subr.mxu0 0.0
        %650 = vmatpush1.msra.mxu0 0.0
        %651 = vmatprep.subr.mxu0 0.0
        %652 = vmatpush1.msra.mxu0 0.0
        %653 = vmatprep.subr.mxu0 0.0
        %654 = vmatpush1.msra.mxu0 0.0
        %655 = vmatprep.subr.mxu0 0.0
        %656 = vmatpush1.msra.mxu0 0.0
        %657 = vmatprep.subr.mxu0 0.0
        %658 = vmatpush1.msra.mxu0 0.0
        %659 = vmatprep.subr.mxu0 0.0
        %660 = vmatpush1.msra.mxu0 0.0
        %661 = vmatprep.subr.mxu0 0.0
        %662 = vmatpush1.msra.mxu0 0.0
        %663 = vmatprep.subr.mxu0 0.0
        %664 = vmatpush1.msra.mxu0 0.0
        %665 = vmatprep.subr.mxu0 0.0
        %666 = vmatpush1.msra.mxu0 0.0
        %667 = vmatprep.subr.mxu0 0.0
        %668 = vmatpush1.msra.mxu0 0.0
        %669 = vmatprep.subr.mxu0 0.0
        %670 = vmatpush1.msra.mxu0 0.0
        %671 = vmatprep.subr.mxu0 0.0
        %672 = vmatpush1.msra.mxu0 0.0
        %673 = vmatprep.subr.mxu0 0.0
        %674 = vmatpush1.msra.mxu0 0.0
        %675 = vmatprep.subr.mxu0 0.0
        %676 = vmatpush1.msra.mxu0 0.0
        %677 = vmatprep.subr.mxu0 0.0
        %678 = vmatpush1.msra.mxu0 0.0
        %679 = vmatprep.subr.mxu0 0.0
        %680 = vmatpush1.msra.mxu0 0.0
        %681 = vmatprep.subr.mxu0 0.0
        %682 = vmatpush1.msra.mxu0 0.0
        %683 = vmatprep.subr.mxu0 0.0
        %684 = vmatpush1.msra.mxu0 0.0
        %685 = vmatprep.mubr.f32.mxu0 0.0
        %686 = vmatmul.mubr.f32.gmra.mrb[0].mxu0 %v619
        %v687 = vpop.f32.mrb[0].mxu0
        %v688 = vadd.f32 %v617, %v687
        %v689 = vpop.f32.mrb[0].mxu0
        %690 = vdwg.mxu0
        %v691 = vld [vmem:[%s3] sm:$0xff]
        %v692 = vld [vmem:[%s3 + $0x8] sm:$0xff]
        %v693 = vld [vmem:[%s3 + $0x10] sm:$0xff]
        %v694 = vld [vmem:[%s3 + $0x18] sm:$0xff]
        %v695 = vld [vmem:[%s3 + $0x20] sm:$0xff]
        %v696 = vld [vmem:[%s3 + $0x28] sm:$0xff]
        %v697 = vld [vmem:[%s3 + $0x30] sm:$0xff]
        %v698 = vld [vmem:[%s3 + $0x38] sm:$0xff]
        %v699 = vld [vmem:[%s4] sm:$0x1]
        %v701 = vsel %vm217, %v557, 0
        %703 = vmatprep.subr.mxu0 0.0
        %704 = vmatpush1.msra.mxu0 %v691
        %705 = vmatprep.subr.mxu0 0.0
        %706 = vmatpush1.msra.mxu0 %v692
        %707 = vmatprep.subr.mxu0 0.0
        %708 = vmatpush1.msra.mxu0 %v693
        %709 = vmatprep.subr.mxu0 0.0
        %710 = vmatpush1.msra.mxu0 %v694
        %711 = vmatprep.subr.mxu0 0.0
        %712 = vmatpush1.msra.mxu0 %v695
        %713 = vmatprep.subr.mxu0 0.0
        %714 = vmatpush1.msra.mxu0 %v696
        %715 = vmatprep.subr.mxu0 0.0
        %716 = vmatpush1.msra.mxu0 %v697
        %717 = vmatprep.subr.mxu0 0.0
        %718 = vmatpush1.msra.mxu0 %v698
        %719 = vmatprep.subr.mxu0 0.0
        %720 = vmatpush1.msra.mxu0 0.0
        %721 = vmatprep.subr.mxu0 0.0
        %722 = vmatpush1.msra.mxu0 0.0
        %723 = vmatprep.subr.mxu0 0.0
        %724 = vmatpush1.msra.mxu0 0.0
        %725 = vmatprep.subr.mxu0 0.0
        %726 = vmatpush1.msra.mxu0 0.0
        %727 = vmatprep.subr.mxu0 0.0
        %728 = vmatpush1.msra.mxu0 0.0
        %729 = vmatprep.subr.mxu0 0.0
        %730 = vmatpush1.msra.mxu0 0.0
        %731 = vmatprep.subr.mxu0 0.0
        %732 = vmatpush1.msra.mxu0 0.0
        %733 = vmatprep.subr.mxu0 0.0
        %734 = vmatpush1.msra.mxu0 0.0
        %735 = vmatprep.subr.mxu0 0.0
        %736 = vmatpush1.msra.mxu0 0.0
        %737 = vmatprep.subr.mxu0 0.0
        %738 = vmatpush1.msra.mxu0 0.0
        %739 = vmatprep.subr.mxu0 0.0
        %740 = vmatpush1.msra.mxu0 0.0
        %741 = vmatprep.subr.mxu0 0.0
        %742 = vmatpush1.msra.mxu0 0.0
        %743 = vmatprep.subr.mxu0 0.0
        %744 = vmatpush1.msra.mxu0 0.0
        %745 = vmatprep.subr.mxu0 0.0
        %746 = vmatpush1.msra.mxu0 0.0
        %747 = vmatprep.subr.mxu0 0.0
        %748 = vmatpush1.msra.mxu0 0.0
        %749 = vmatprep.subr.mxu0 0.0
        %750 = vmatpush1.msra.mxu0 0.0
        %751 = vmatprep.subr.mxu0 0.0
        %752 = vmatpush1.msra.mxu0 0.0
        %753 = vmatprep.subr.mxu0 0.0
        %754 = vmatpush1.msra.mxu0 0.0
        %755 = vmatprep.subr.mxu0 0.0
        %756 = vmatpush1.msra.mxu0 0.0
        %757 = vmatprep.subr.mxu0 0.0
        %758 = vmatpush1.msra.mxu0 0.0
        %759 = vmatprep.subr.mxu0 0.0
        %760 = vmatpush1.msra.mxu0 0.0
        %761 = vmatprep.subr.mxu0 0.0
        %762 = vmatpush1.msra.mxu0 0.0
        %763 = vmatprep.subr.mxu0 0.0
        %764 = vmatpush1.msra.mxu0 0.0
        %765 = vmatprep.subr.mxu0 0.0
        %766 = vmatpush1.msra.mxu0 0.0
        %767 = vmatprep.mubr.f32.mxu0 0.0
        %768 = vmatmul.mubr.f32.gmra.mrb[0].mxu0 %v701
        %v769 = vpop.f32.mrb[0].mxu0
        %v770 = vadd.f32 %v699, %v769
        %v771 = vpop.f32.mrb[0].mxu0
        %772 = vdwg.mxu0
        %v773 = vmul.f32 %v688, %v607
        %v774 = vmul.f32 %v770, %v608
        %v775 = vadd.f32 %v773, %v774
        %s776 = scalar_lea.vmem [#allocation2], %s17
        %vm777 = vcmask 253952
        %778 = vst.msk [vmem:[%s776] sm:$0x1] %vm777, %v775
        // Predicated region
        $region41: #{tpu_custom_call.1} parent=39 // pred_check
          %p779 = pneg %p140
        $region42: #{tpu_custom_call.1} parent=39 // pred_check_branch
          %781 = sbr.rel (%p779) target = $region44
        $region43: #{tpu_custom_call.1} parent=39 // pred_region
          %s783 = ssub.s32 32, 32
          %784 = vsyncadd [#allocation3], %s783
          %s786 = sshll.u32 [#allocation2], 4
          %s787 = int_to_ptr.vmem [resolvable:$true] %s786
          %789 = dma.vmem_to_hbm [thread:$0]  %s787, 32, %s5, [#allocation3]
        $region44: #{tpu_custom_call.1} parent=39 // pred_fallthru
          _
        // Predicated region
        $region45: #{tpu_custom_call.1} parent=39 // pred_check
          %p790 = pneg %p140
        $region46: #{tpu_custom_call.1} parent=39 // pred_check_branch
          %792 = sbr.rel (%p790) target = $region48
        $region47: #{tpu_custom_call.1} parent=39 // pred_region
          %793 = dma.done [#allocation3], 32
        $region48: #{tpu_custom_call.1} parent=39 // pred_fallthru
          _
      $region40: #{tpu_custom_call.1} parent=5 // pred_fallthru
        _
      %p794 = scmp.le.s32.totalorder 2, %s12
      // Predicated region
      $region49: #{tpu_custom_call.1} parent=5 // pred_check
        %p795 = pneg %p794
      $region50: #{tpu_custom_call.1} parent=5 // pred_check_branch
        %797 = sbr.rel (%p795) target = $region52
      $region51: #{tpu_custom_call.1} parent=5 // pred_region
        %s798 = ssub.s32 %s12, 2
      $region52: #{tpu_custom_call.1} parent=5 // pred_fallthru
        _
    $region6: #{tpu_custom_call.1} parent=1 // loop_footer
      %s16 = sadd.s32 1, %s12
    $region7: #{tpu_custom_call.1} parent=1 // loop_footer_branch
      %11 = sbr.rel target = $region3
    $region8: #{tpu_custom_call.1} parent=1 // loop_exit
      _
    %799 = vsyncpa [#allocation3], 1
    %s800 = scalar_lea.sflag [#allocation3], 1
    %801 = vsyncpa %s800, 1

// kernel: tpu_custom_call.1
$region0: #{tpu_custom_call.1}
  #allocation0 [shape = 'u32[]', space=smem, size = 0x4, offset = 0x4, fixed_abs, tag = 'smem constant byte address 0x4 - core index']
  #allocation1 [shape = 'u32[144,128]{1,0:T(1,128)}', space=vmem, size = 0x12000, scoped, tag = 'internal scratch']
  %s0 = inlined_call_operand.vmem [shape: f32[2,48,64], index: 0, kind: input, shape index: {}]
  %s1 = inlined_call_operand.vmem [shape: f32[64,32], index: 1, kind: input, shape index: {}]
  %s2 = inlined_call_operand.vmem [shape: f32[1,32], index: 2, kind: input, shape index: {}]
  %s3 = inlined_call_operand.vmem [shape: f32[64,32], index: 3, kind: input, shape index: {}]
  %s4 = inlined_call_operand.vmem [shape: f32[1,32], index: 4, kind: input, shape index: {}]
  %s5 = inlined_call_operand.hbm [shape: f32[2,32], index: 5, kind: output, shape index: {}]
  %s6 = sld [smem:[#allocation0]]
  $region53: #{tpu_custom_call.1} parent=0
    _
  %s8 = ssub.s32 1, %s6
  %s9 = scalar_select 0, %s8, %s6
  $region1: #{tpu_custom_call.1} parent=0
    #allocation2 [shape = 'u8[1024]{0}', space=vmem, size = 0x400, scoped, tag = 'output window, operand 0, single buffered']
    #allocation3 [shape = 's32[2]{0}', space=sflag, size = 0x8, scoped, tag = 'scoped memory for tpu_custom_call.1']
    %10 = vsyncpa [#allocation3], 0
    loop: start=0, step=1, limit=4
    $region2: #{tpu_custom_call.1} parent=1 // loop_pre_header
      _
    $region3: #{tpu_custom_call.1} parent=1 // loop_header
      %s12 = sphi 0, %s16
      %p13 = scmp.ge.s32.totalorder %s12, 4
      %s22 = sphi 0, %s24
      %s25 = sphi 0, %s22
      %s26 = sphi 0, %s25
      %s42 = sphi 0, %s26
      %s46 = sphi 0, %s46
      %s48 = sphi 0, %s46
      %s49 = sphi 0, %s48
      %s63 = sphi 0, %s49
      %s67 = sphi 0, %s67
      %s69 = sphi 0, %s67
      %s70 = sphi 0, %s69
      %s84 = sphi 0, %s70
      %s88 = sphi 0, %s88
      %s90 = sphi 0, %s88
      %s91 = sphi 0, %s90
      %s105 = sphi 0, %s91
      %s109 = sphi 0, %s109
      %s111 = sphi 0, %s109
      %s112 = sphi 0, %s111
      %s126 = sphi 0, %s112
      %s130 = sphi 0, %s130
      %s132 = sphi 0, %s130
      %s133 = sphi 0, %s132
      %s147 = sphi 0, %s133
    $region4: #{tpu_custom_call.1} parent=1 // loop_header_branch
      %15 = sbr.rel (%p13) target = $region8
    $region5: #{tpu_custom_call.1} parent=1 // loop_body
      %s17 = ssub.s32 %s12, 1
      %s18 = ssub.s32 %s12, 2
      %s19 = sadd.s32 %s12, 1
      %s20 = ssub.s32 %s12, %s19
      %p21 = scmp.eq.s32.totalorder %s20, 0
      %s23 = sadd.s32 %s22, 1
      %s24 = scalar_select %p21, %s22, %s23
      %p27 = pneg %p21
      %p28 = scmp.eq.s32.totalorder %s12, 1
      %p29 = por %p27, %p28
      %p30 = scmp.ne.s32.totalorder %s22, %s25
      %p31 = scmp.eq.s32.totalorder %s12, 0
      %p32 = por %p30, %p31
      %p33 = scmp.ne.s32.totalorder %s22, %s25
      %p34 = scmp.eq.s32.totalorder %s17, 1
      %p35 = por %p33, %p34
      %p36 = scmp.ne.s32.totalorder %s25, %s26
      %p37 = scmp.eq.s32.totalorder %s17, 0
      %p38 = por %p36, %p37
      %p39 = scmp.ne.s32.totalorder %s25, %s26
      %p40 = scmp.eq.s32.totalorder %s18, 1
      %p41 = por %p39, %p40
      %p43 = scmp.ne.s32.totalorder %s26, %s42
      %p44 = scmp.eq.s32.totalorder %s18, 0
      %p45 = por %p43, %p44
      %s47 = sadd.s32 %s46, 1
      %p50 = scmp.eq.s32.totalorder %s12, 1
      %p51 = scmp.ne.s32.totalorder %s46, %s48
      %p52 = scmp.eq.s32.totalorder %s12, 0
      %p53 = por %p51, %p52
      %p54 = scmp.ne.s32.totalorder %s46, %s48
      %p55 = scmp.eq.s32.totalorder %s17, 1
      %p56 = por %p54, %p55
      %p57 = scmp.ne.s32.totalorder %s48, %s49
      %p58 = scmp.eq.s32.totalorder %s17, 0
      %p59 = por %p57, %p58
      %p60 = scmp.ne.s32.totalorder %s48, %s49
      %p61 = scmp.eq.s32.totalorder %s18, 1
      %p62 = por %p60, %p61
      %p64 = scmp.ne.s32.totalorder %s49, %s63
      %p65 = scmp.eq.s32.totalorder %s18, 0
      %p66 = por %p64, %p65
      %s68 = sadd.s32 %s67, 1
      %p71 = scmp.eq.s32.totalorder %s12, 1
      %p72 = scmp.ne.s32.totalorder %s67, %s69
      %p73 = scmp.eq.s32.totalorder %s12, 0
      %p74 = por %p72, %p73
      %p75 = scmp.ne.s32.totalorder %s67, %s69
      %p76 = scmp.eq.s32.totalorder %s17, 1
      %p77 = por %p75, %p76
      %p78 = scmp.ne.s32.totalorder %s69, %s70
      %p79 = scmp.eq.s32.totalorder %s17, 0
      %p80 = por %p78, %p79
      %p81 = scmp.ne.s32.totalorder %s69, %s70
      %p82 = scmp.eq.s32.totalorder %s18, 1
      %p83 = por %p81, %p82
      %p85 = scmp.ne.s32.totalorder %s70, %s84
      %p86 = scmp.eq.s32.totalorder %s18, 0
      %p87 = por %p85, %p86
      %s89 = sadd.s32 %s88, 1
      %p92 = scmp.eq.s32.totalorder %s12, 1
      %p93 = scmp.ne.s32.totalorder %s88, %s90
      %p94 = scmp.eq.s32.totalorder %s12, 0
      %p95 = por %p93, %p94
      %p96 = scmp.ne.s32.totalorder %s88, %s90
      %p97 = scmp.eq.s32.totalorder %s17, 1
      %p98 = por %p96, %p97
      %p99 = scmp.ne.s32.totalorder %s90, %s91
      %p100 = scmp.eq.s32.totalorder %s17, 0
      %p101 = por %p99, %p100
      %p102 = scmp.ne.s32.totalorder %s90, %s91
      %p103 = scmp.eq.s32.totalorder %s18, 1
      %p104 = por %p102, %p103
      %p106 = scmp.ne.s32.totalorder %s91, %s105
      %p107 = scmp.eq.s32.totalorder %s18, 0
      %p108 = por %p106, %p107
      %s110 = sadd.s32 %s109, 1
      %p113 = scmp.eq.s32.totalorder %s12, 1
      %p114 = scmp.ne.s32.totalorder %s109, %s111
      %p115 = scmp.eq.s32.totalorder %s12, 0
      %p116 = por %p114, %p115
      %p117 = scmp.ne.s32.totalorder %s109, %s111
      %p118 = scmp.eq.s32.totalorder %s17, 1
      %p119 = por %p117, %p118
      %p120 = scmp.ne.s32.totalorder %s111, %s112
      %p121 = scmp.eq.s32.totalorder %s17, 0
      %p122 = por %p120, %p121
      %p123 = scmp.ne.s32.totalorder %s111, %s112
      %p124 = scmp.eq.s32.totalorder %s18, 1
      %p125 = por %p123, %p124
      %p127 = scmp.ne.s32.totalorder %s112, %s126
      %p128 = scmp.eq.s32.totalorder %s18, 0
      %p129 = por %p127, %p128
      %s131 = sadd.s32 %s130, 1
      %p134 = scmp.eq.s32.totalorder %s12, 1
      %p135 = scmp.ne.s32.totalorder %s130, %s132
      %p136 = scmp.eq.s32.totalorder %s12, 0
      %p137 = por %p135, %p136
      %p138 = scmp.ne.s32.totalorder %s130, %s132
      %p139 = scmp.eq.s32.totalorder %s17, 1
      %p140 = por %p138, %p139
      %p141 = scmp.ne.s32.totalorder %s132, %s133
      %p142 = scmp.eq.s32.totalorder %s17, 0
      %p143 = por %p141, %p142
      %p144 = scmp.ne.s32.totalorder %s132, %s133
      %p145 = scmp.eq.s32.totalorder %s18, 1
      %p146 = por %p144, %p145
      %p148 = scmp.ne.s32.totalorder %s133, %s147
      %p149 = scmp.eq.s32.totalorder %s18, 0
      %p150 = por %p148, %p149
      %p151 = scmp.le.s32.totalorder 1, %s12
      %p152 = scmp.lt.s32.totalorder %s12, 3
      %p153 = pnand %p151, %p152
      %p154 = pneg %p153
      // Predicated region
      $region9: #{tpu_custom_call.1} parent=5 // pred_check
        _
      $region10: #{tpu_custom_call.1} parent=5 // pred_check_branch
        %156 = sbr.rel (%p153) target = $region12
      $region11: #{tpu_custom_call.1} parent=5 // pred_region
        %s157 = ssub.s32 %s12, 1
        // Predicated region
        $region13: #{tpu_custom_call.1} parent=11 // pred_check
          %p158 = pneg %p59
        $region14: #{tpu_custom_call.1} parent=11 // pred_check_branch
          %160 = sbr.rel (%p158) target = $region16
        $region15: #{tpu_custom_call.1} parent=11 // pred_region
          _
        $region16: #{tpu_custom_call.1} parent=11 // pred_fallthru
          _
        // Predicated region
        $region17: #{tpu_custom_call.1} parent=11 // pred_check
          %p161 = pneg %p80
        $region18: #{tpu_custom_call.1} parent=11 // pred_check_branch
          %163 = sbr.rel (%p161) target = $region20
        $region19: #{tpu_custom_call.1} parent=11 // pred_region
          _
        $region20: #{tpu_custom_call.1} parent=11 // pred_fallthru
          _
        // Predicated region
        $region21: #{tpu_custom_call.1} parent=11 // pred_check
          %p164 = pneg %p101
        $region22: #{tpu_custom_call.1} parent=11 // pred_check_branch
          %166 = sbr.rel (%p164) target = $region24
        $region23: #{tpu_custom_call.1} parent=11 // pred_region
          _
        $region24: #{tpu_custom_call.1} parent=11 // pred_fallthru
          _
        // Predicated region
        $region25: #{tpu_custom_call.1} parent=11 // pred_check
          %p167 = pneg %p122
        $region26: #{tpu_custom_call.1} parent=11 // pred_check_branch
          %169 = sbr.rel (%p167) target = $region28
        $region27: #{tpu_custom_call.1} parent=11 // pred_region
          _
        $region28: #{tpu_custom_call.1} parent=11 // pred_fallthru
          _
      $region12: #{tpu_custom_call.1} parent=5 // pred_fallthru
        _
      %p170 = scmp.lt.s32.totalorder %s12, 2
      // Predicated region
      $region29: #{tpu_custom_call.1} parent=5 // pred_check
        %p171 = pneg %p170
      $region30: #{tpu_custom_call.1} parent=5 // pred_check_branch
        %173 = sbr.rel (%p171) target = $region32
      $region31: #{tpu_custom_call.1} parent=5 // pred_region
        // Predicated region
        $region33: #{tpu_custom_call.1} parent=31 // pred_check
          %p174 = pneg %p32
        $region34: #{tpu_custom_call.1} parent=31 // pred_check_branch
          %176 = sbr.rel (%p174) target = $region36
        $region35: #{tpu_custom_call.1} parent=31 // pred_region
          %p177 = scmp.lt.s32.totalorder %s12, 1
          %s178 = scalar_select %p177, %s12, 1
          %s179 = smul.addr %s178, 6
          %s180 = smul.addr %s179, 8
          %s181 = scalar_lea.vmem %s0, %s180
        $region36: #{tpu_custom_call.1} parent=31 // pred_fallthru
          _
      $region32: #{tpu_custom_call.1} parent=5 // pred_fallthru
        _
      %p182 = scmp.le.s32.totalorder 1, %s12
      %p183 = scmp.lt.s32.totalorder %s12, 3
      %p184 = pnand %p182, %p183
      %p185 = pneg %p184
      // Predicated region
      $region37: #{tpu_custom_call.1} parent=5 // pred_check
        _
      $region38: #{tpu_custom_call.1} parent=5 // pred_check_branch
        %187 = sbr.rel (%p184) target = $region40
      $region39: #{tpu_custom_call.1} parent=5 // pred_region
        %s188 = ssub.s32 %s12, 1
        %p189 = scmp.lt.s32.totalorder %s17, 1
        %s190 = scalar_select %p189, %s17, 1
        %s191 = smul.addr %s190, 6
        %s192 = smul.addr %s191, 8
        %s193 = scalar_lea.vmem %s0, %s192
        %p194 = pneg %p38
        %p195 = pneg %p35
        %p196 = pneg %p59
        %p197 = pneg %p56
        %p198 = pneg %p80
        %p199 = pneg %p77
        %p200 = pneg %p101
        %p201 = pneg %p98
        %p202 = pneg %p122
        %p203 = pneg %p119
        %p204 = pneg %p143
        %p205 = pneg %p140
        %p206 = scmp.lt.s32.totalorder %s17, 1
        %s207 = scalar_select %p206, %s17, 1
        %s208 = smul.addr %s207, 6
        %s209 = smul.addr %s208, 8
        %s210 = scalar_lea.vmem %s0, %s209
        %v211 = vld [vmem:[%s210] sm:$0xff]
        %v212 = vld [vmem:[%s210 + $0x8] sm:$0xff]
        %v213 = vld [vmem:[%s210 + $0x10] sm:$0xff]
        %v214 = vld [vmem:[%s210 + $0x18] sm:$0xff]
        %v215 = vld [vmem:[%s210 + $0x20] sm:$0xff]
        %v216 = vld [vmem:[%s210 + $0x28] sm:$0xff]
        %vm217 = vcmask 523264
        %v218 = vsel %vm217, %v211, 0.0
        %v219 = vsel %vm217, %v212, 0.0
        %v220 = vadd.f32 %v218, %v219
        %v221 = vsel %vm217, %v213, 0.0
        %v222 = vadd.f32 %v220, %v221
        %v223 = vsel %vm217, %v214, 0.0
        %v224 = vadd.f32 %v222, %v223
        %v225 = vrot.slane %v224, 4
        %v226 = vadd.f32 %v224, %v225
        %v227 = vrot.slane %v226, 2
        %v228 = vadd.f32 %v226, %v227
        %v229 = vrot.slane %v228, 1
        %v230 = vadd.f32 %v228, %v229
        %v231 = vrcp.pop 32.0
        %v232 = vmul.f32 %v230, %v231
        %v233 = vsel %vm217, %v215, 0.0
        %v234 = vsel %vm217, %v216, 0.0
        %v235 = vadd.f32 %v233, %v234
        %v236 = vrot.slane %v235, 4
        %v237 = vadd.f32 %v235, %v236
        %v238 = vrot.slane %v237, 2
        %v239 = vadd.f32 %v237, %v238
        %v240 = vrot.slane %v239, 1
        %v241 = vadd.f32 %v239, %v240
        %v242 = vrcp.pop 16.0
        %v243 = vmul.f32 %v241, %v242
        %v245 = vsel %vm217, %v232, 0
        %v248 = vsel %vm217, %v215, 0
        %v251 = vsel %vm217, %v216, 0
        %253 = vmatprep.subr.mxu0 0.0
        %254 = vmatpush1.xpose.msra.mxu0 %v248
        %255 = vmatprep.subr.mxu0 0.0
        %256 = vmatpush1.xpose.msra.mxu0 %v251
        %257 = vmatprep.subr.mxu0 0.0
        %258 = vmatpush1.xpose.msra.mxu0 0.0
        %259 = vmatprep.subr.mxu0 0.0
        %260 = vmatpush1.xpose.msra.mxu0 0.0
        %261 = vmatprep.subr.mxu0 0.0
        %262 = vmatpush1.xpose.msra.mxu0 0.0
        %263 = vmatprep.subr.mxu0 0.0
        %264 = vmatpush1.xpose.msra.mxu0 0.0
        %265 = vmatprep.subr.mxu0 0.0
        %266 = vmatpush1.xpose.msra.mxu0 0.0
        %267 = vmatprep.subr.mxu0 0.0
        %268 = vmatpush1.xpose.msra.mxu0 0.0
        %269 = vmatprep.subr.mxu0 0.0
        %270 = vmatpush1.xpose.msra.mxu0 0.0
        %271 = vmatprep.subr.mxu0 0.0
        %272 = vmatpush1.xpose.msra.mxu0 0.0
        %273 = vmatprep.subr.mxu0 0.0
        %274 = vmatpush1.xpose.msra.mxu0 0.0
        %275 = vmatprep.subr.mxu0 0.0
        %276 = vmatpush1.xpose.msra.mxu0 0.0
        %277 = vmatprep.subr.mxu0 0.0
        %278 = vmatpush1.xpose.msra.mxu0 0.0
        %279 = vmatprep.subr.mxu0 0.0
        %280 = vmatpush1.xpose.msra.mxu0 0.0
        %281 = vmatprep.subr.mxu0 0.0
        %282 = vmatpush1.xpose.msra.mxu0 0.0
        %283 = vmatprep.subr.mxu0 0.0
        %284 = vmatpush1.xpose.msra.mxu0 0.0
        %285 = vmatprep.subr.mxu0 0.0
        %286 = vmatpush1.xpose.msra.mxu0 0.0
        %287 = vmatprep.subr.mxu0 0.0
        %288 = vmatpush1.xpose.msra.mxu0 0.0
        %289 = vmatprep.subr.mxu0 0.0
        %290 = vmatpush1.xpose.msra.mxu0 0.0
        %291 = vmatprep.subr.mxu0 0.0
        %292 = vmatpush1.xpose.msra.mxu0 0.0
        %293 = vmatprep.subr.mxu0 0.0
        %294 = vmatpush1.xpose.msra.mxu0 0.0
        %295 = vmatprep.subr.mxu0 0.0
        %296 = vmatpush1.xpose.msra.mxu0 0.0
        %297 = vmatprep.subr.mxu0 0.0
        %298 = vmatpush1.xpose.msra.mxu0 0.0
        %299 = vmatprep.subr.mxu0 0.0
        %300 = vmatpush1.xpose.msra.mxu0 0.0
        %301 = vmatprep.subr.mxu0 0.0
        %302 = vmatpush1.xpose.msra.mxu0 0.0
        %303 = vmatprep.subr.mxu0 0.0
        %304 = vmatpush1.xpose.msra.mxu0 0.0
        %305 = vmatprep.subr.mxu0 0.0
        %306 = vmatpush1.xpose.msra.mxu0 0.0
        %307 = vmatprep.subr.mxu0 0.0
        %308 = vmatpush1.xpose.msra.mxu0 0.0
        %309 = vmatprep.subr.mxu0 0.0
        %310 = vmatpush1.xpose.msra.mxu0 0.0
        %311 = vmatprep.subr.mxu0 0.0
        %312 = vmatpush1.xpose.msra.mxu0 0.0
        %313 = vmatprep.subr.mxu0 0.0
        %314 = vmatpush1.xpose.msra.mxu0 0.0
        %315 = vmatprep.subr.mxu0 0.0
        %316 = vmatpush1.xpose.msra.mxu0 0.0
        %317 = vmatprep.mubr.f32.mxu0 0.0
        %318 = vmatmul.mubr.f32.gmra.mrb[0].mxu0 %v245
        %v319 = vpop.f32.mrb[0].mxu0
        %v320 = vadd.f32 0.0, %v319
        %v321 = vpop.f32.mrb[0].mxu0
        %322 = vdwg.mxu0
        %vm323 = vcmask 130048
        %v325 = vsel %vm323, %v320, 0
        %327 = vmatprep.subr.mxu0 0.0
        %328 = vmatpush1.msra.mxu0 %v215
        %329 = vmatprep.subr.mxu0 0.0
        %330 = vmatpush1.msra.mxu0 %v216
        %331 = vmatprep.subr.mxu0 0.0
        %332 = vmatpush1.msra.mxu0 0.0
        %333 = vmatprep.subr.mxu0 0.0
        %334 = vmatpush1.msra.mxu0 0.0
        %335 = vmatprep.subr.mxu0 0.0
        %336 = vmatpush1.msra.mxu0 0.0
        %337 = vmatprep.subr.mxu0 0.0
        %338 = vmatpush1.msra.mxu0 0.0
        %339 = vmatprep.subr.mxu0 0.0
        %340 = vmatpush1.msra.mxu0 0.0
        %341 = vmatprep.subr.mxu0 0.0
        %342 = vmatpush1.msra.mxu0 0.0
        %343 = vmatprep.subr.mxu0 0.0
        %344 = vmatpush1.msra.mxu0 0.0
        %345 = vmatprep.subr.mxu0 0.0
        %346 = vmatpush1.msra.mxu0 0.0
        %347 = vmatprep.subr.mxu0 0.0
        %348 = vmatpush1.msra.mxu0 0.0
        %349 = vmatprep.subr.mxu0 0.0
        %350 = vmatpush1.msra.mxu0 0.0
        %351 = vmatprep.subr.mxu0 0.0
        %352 = vmatpush1.msra.mxu0 0.0
        %353 = vmatprep.subr.mxu0 0.0
        %354 = vmatpush1.msra.mxu0 0.0
        %355 = vmatprep.subr.mxu0 0.0
        %356 = vmatpush1.msra.mxu0 0.0
        %357 = vmatprep.subr.mxu0 0.0
        %358 = vmatpush1.msra.mxu0 0.0
        %359 = vmatprep.subr.mxu0 0.0
        %360 = vmatpush1.msra.mxu0 0.0
        %361 = vmatprep.subr.mxu0 0.0
        %362 = vmatpush1.msra.mxu0 0.0
        %363 = vmatprep.subr.mxu0 0.0
        %364 = vmatpush1.msra.mxu0 0.0
        %365 = vmatprep.subr.mxu0 0.0
        %366 = vmatpush1.msra.mxu0 0.0
        %367 = vmatprep.subr.mxu0 0.0
        %368 = vmatpush1.msra.mxu0 0.0
        %369 = vmatprep.subr.mxu0 0.0
        %370 = vmatpush1.msra.mxu0 0.0
        %371 = vmatprep.subr.mxu0 0.0
        %372 = vmatpush1.msra.mxu0 0.0
        %373 = vmatprep.subr.mxu0 0.0
        %374 = vmatpush1.msra.mxu0 0.0
        %375 = vmatprep.subr.mxu0 0.0
        %376 = vmatpush1.msra.mxu0 0.0
        %377 = vmatprep.subr.mxu0 0.0
        %378 = vmatpush1.msra.mxu0 0.0
        %379 = vmatprep.subr.mxu0 0.0
        %380 = vmatpush1.msra.mxu0 0.0
        %381 = vmatprep.subr.mxu0 0.0
        %382 = vmatpush1.msra.mxu0 0.0
        %383 = vmatprep.subr.mxu0 0.0
        %384 = vmatpush1.msra.mxu0 0.0
        %385 = vmatprep.subr.mxu0 0.0
        %386 = vmatpush1.msra.mxu0 0.0
        %387 = vmatprep.subr.mxu0 0.0
        %388 = vmatpush1.msra.mxu0 0.0
        %389 = vmatprep.subr.mxu0 0.0
        %390 = vmatpush1.msra.mxu0 0.0
        %391 = vmatprep.mubr.f32.mxu0 0.0
        %392 = vmatmul.mubr.f32.gmra.mrb[0].mxu0 %v325
        %v393 = vpop.f32.mrb[0].mxu0
        %v394 = vadd.f32 0.0, %v393
        %v395 = vpop.f32.mrb[0].mxu0
        %396 = vdwg.mxu0
        %v397 = vadd.f32 %v232, %v394
        %v399 = vsel %vm217, %v243, 0
        %v402 = vsel %vm217, %v211, 0
        %v405 = vsel %vm217, %v212, 0
        %v408 = vsel %vm217, %v213, 0
        %v411 = vsel %vm217, %v214, 0
        %413 = vmatprep.subr.mxu0 0.0
        %414 = vmatpush1.xpose.msra.mxu0 %v402
        %415 = vmatprep.subr.mxu0 0.0
        %416 = vmatpush1.xpose.msra.mxu0 %v405
        %417 = vmatprep.subr.mxu0 0.0
        %418 = vmatpush1.xpose.msra.mxu0 %v408
        %419 = vmatprep.subr.mxu0 0.0
        %420 = vmatpush1.xpose.msra.mxu0 %v411
        %421 = vmatprep.subr.mxu0 0.0
        %422 = vmatpush1.xpose.msra.mxu0 0.0
        %423 = vmatprep.subr.mxu0 0.0
        %424 = vmatpush1.xpose.msra.mxu0 0.0
        %425 = vmatprep.subr.mxu0 0.0
        %426 = vmatpush1.xpose.msra.mxu0 0.0
        %427 = vmatprep.subr.mxu0 0.0
        %428 = vmatpush1.xpose.msra.mxu0 0.0
        %429 = vmatprep.subr.mxu0 0.0
        %430 = vmatpush1.xpose.msra.mxu0 0.0
        %431 = vmatprep.subr.mxu0 0.0
        %432 = vmatpush1.xpose.msra.mxu0 0.0
        %433 = vmatprep.subr.mxu0 0.0
        %434 = vmatpush1.xpose.msra.mxu0 0.0
        %435 = vmatprep.subr.mxu0 0.0
        %436 = vmatpush1.xpose.msra.mxu0 0.0
        %437 = vmatprep.subr.mxu0 0.0
        %438 = vmatpush1.xpose.msra.mxu0 0.0
        %439 = vmatprep.subr.mxu0 0.0
        %440 = vmatpush1.xpose.msra.mxu0 0.0
        %441 = vmatprep.subr.mxu0 0.0
        %442 = vmatpush1.xpose.msra.mxu0 0.0
        %443 = vmatprep.subr.mxu0 0.0
        %444 = vmatpush1.xpose.msra.mxu0 0.0
        %445 = vmatprep.subr.mxu0 0.0
        %446 = vmatpush1.xpose.msra.mxu0 0.0
        %447 = vmatprep.subr.mxu0 0.0
        %448 = vmatpush1.xpose.msra.mxu0 0.0
        %449 = vmatprep.subr.mxu0 0.0
        %450 = vmatpush1.xpose.msra.mxu0 0.0
        %451 = vmatprep.subr.mxu0 0.0
        %452 = vmatpush1.xpose.msra.mxu0 0.0
        %453 = vmatprep.subr.mxu0 0.0
        %454 = vmatpush1.xpose.msra.mxu0 0.0
        %455 = vmatprep.subr.mxu0 0.0
        %456 = vmatpush1.xpose.msra.mxu0 0.0
        %457 = vmatprep.subr.mxu0 0.0
        %458 = vmatpush1.xpose.msra.mxu0 0.0
        %459 = vmatprep.subr.mxu0 0.0
        %460 = vmatpush1.xpose.msra.mxu0 0.0
        %461 = vmatprep.subr.mxu0 0.0
        %462 = vmatpush1.xpose.msra.mxu0 0.0
        %463 = vmatprep.subr.mxu0 0.0
        %464 = vmatpush1.xpose.msra.mxu0 0.0
        %465 = vmatprep.subr.mxu0 0.0
        %466 = vmatpush1.xpose.msra.mxu0 0.0
        %467 = vmatprep.subr.mxu0 0.0
        %468 = vmatpush1.xpose.msra.mxu0 0.0
        %469 = vmatprep.subr.mxu0 0.0
        %470 = vmatpush1.xpose.msra.mxu0 0.0
        %471 = vmatprep.subr.mxu0 0.0
        %472 = vmatpush1.xpose.msra.mxu0 0.0
        %473 = vmatprep.subr.mxu0 0.0
        %474 = vmatpush1.xpose.msra.mxu0 0.0
        %475 = vmatprep.subr.mxu0 0.0
        %476 = vmatpush1.xpose.msra.mxu0 0.0
        %477 = vmatprep.mubr.f32.mxu0 0.0
        %478 = vmatmul.mubr.f32.gmra.mrb[0].mxu0 %v399
        %v479 = vpop.f32.mrb[0].mxu0
        %v480 = vadd.f32 0.0, %v479
        %v481 = vpop.f32.mrb[0].mxu0
        %482 = vdwg.mxu0
        %vm483 = vcmask 261120
        %v485 = vsel %vm483, %v480, 0
        %487 = vmatprep.subr.mxu0 0.0
        %488 = vmatpush1.msra.mxu0 %v211
        %489 = vmatprep.subr.mxu0 0.0
        %490 = vmatpush1.msra.mxu0 %v212
        %491 = vmatprep.subr.mxu0 0.0
        %492 = vmatpush1.msra.mxu0 %v213
        %493 = vmatprep.subr.mxu0 0.0
        %494 = vmatpush1.msra.mxu0 %v214
        %495 = vmatprep.subr.mxu0 0.0
        %496 = vmatpush1.msra.mxu0 0.0
        %497 = vmatprep.subr.mxu0 0.0
        %498 = vmatpush1.msra.mxu0 0.0
        %499 = vmatprep.subr.mxu0 0.0
        %500 = vmatpush1.msra.mxu0 0.0
        %501 = vmatprep.subr.mxu0 0.0
        %502 = vmatpush1.msra.mxu0 0.0
        %503 = vmatprep.subr.mxu0 0.0
        %504 = vmatpush1.msra.mxu0 0.0
        %505 = vmatprep.subr.mxu0 0.0
        %506 = vmatpush1.msra.mxu0 0.0
        %507 = vmatprep.subr.mxu0 0.0
        %508 = vmatpush1.msra.mxu0 0.0
        %509 = vmatprep.subr.mxu0 0.0
        %510 = vmatpush1.msra.mxu0 0.0
        %511 = vmatprep.subr.mxu0 0.0
        %512 = vmatpush1.msra.mxu0 0.0
        %513 = vmatprep.subr.mxu0 0.0
        %514 = vmatpush1.msra.mxu0 0.0
        %515 = vmatprep.subr.mxu0 0.0
        %516 = vmatpush1.msra.mxu0 0.0
        %517 = vmatprep.subr.mxu0 0.0
        %518 = vmatpush1.msra.mxu0 0.0
        %519 = vmatprep.subr.mxu0 0.0
        %520 = vmatpush1.msra.mxu0 0.0
        %521 = vmatprep.subr.mxu0 0.0
        %522 = vmatpush1.msra.mxu0 0.0
        %523 = vmatprep.subr.mxu0 0.0
        %524 = vmatpush1.msra.mxu0 0.0
        %525 = vmatprep.subr.mxu0 0.0
        %526 = vmatpush1.msra.mxu0 0.0
        %527 = vmatprep.subr.mxu0 0.0
        %528 = vmatpush1.msra.mxu0 0.0
        %529 = vmatprep.subr.mxu0 0.0
        %530 = vmatpush1.msra.mxu0 0.0
        %531 = vmatprep.subr.mxu0 0.0
        %532 = vmatpush1.msra.mxu0 0.0
        %533 = vmatprep.subr.mxu0 0.0
        %534 = vmatpush1.msra.mxu0 0.0
        %535 = vmatprep.subr.mxu0 0.0
        %536 = vmatpush1.msra.mxu0 0.0
        %537 = vmatprep.subr.mxu0 0.0
        %538 = vmatpush1.msra.mxu0 0.0
        %539 = vmatprep.subr.mxu0 0.0
        %540 = vmatpush1.msra.mxu0 0.0
        %541 = vmatprep.subr.mxu0 0.0
        %542 = vmatpush1.msra.mxu0 0.0
        %543 = vmatprep.subr.mxu0 0.0
        %544 = vmatpush1.msra.mxu0 0.0
        %545 = vmatprep.subr.mxu0 0.0
        %546 = vmatpush1.msra.mxu0 0.0
        %547 = vmatprep.subr.mxu0 0.0
        %548 = vmatpush1.msra.mxu0 0.0
        %549 = vmatprep.subr.mxu0 0.0
        %550 = vmatpush1.msra.mxu0 0.0
        %551 = vmatprep.mubr.f32.mxu0 0.0
        %552 = vmatmul.mubr.f32.gmra.mrb[0].mxu0 %v485
        %v553 = vpop.f32.mrb[0].mxu0
        %v554 = vadd.f32 0.0, %v553
        %v555 = vpop.f32.mrb[0].mxu0
        %556 = vdwg.mxu0
        %v557 = vadd.f32 %v243, %v554
        %vm558 = vcmask 516096
        %v559 = vsel %vm558, %v397, 0.0
        %560 = vadd.xlane.f32.xlu0 %v559
        %v561 = vpop.xlane.xlu0 %560
        %v562 = vrcp.pop 64.0
        %v563 = vmul.f32 %v561, %v562
        %v564 = vsub.f32 %v397, %v563
        %v565 = vmul.f32 %v564, %v564
        %v566 = vsel %vm558, %v565, 0.0
        %567 = vadd.xlane.f32.xlu0 %v566
        %v568 = vpop.xlane.xlu0 %567
        %v569 = vrcp.pop 63.0
        %v570 = vmul.f32 %v568, %v569
        %v571 = vrsqrt.pop %v570
        %v572 = vmul.f32 %v570, %v571
        %vm573 = vcmp.eq.f32.partialorder %v570, inf
        %v574 = vsel %vm573, %v570, %v572
        %vm575 = vcmp.eq.f32.partialorder %v570, 0.0
        %v576 = vand.u32 %v570, 2147483648
        %v577 = vsel %vm575, %v576, %v574
        %v578 = vsel %vm558, %v557, 0.0
        %579 = vadd.xlane.f32.xlu0 %v578
        %v580 = vpop.xlane.xlu0 %579
        %v581 = vmul.f32 %v580, %v562
        %v582 = vsub.f32 %v557, %v581
        %v583 = vmul.f32 %v582, %v582
        %v584 = vsel %vm558, %v583, 0.0
        %585 = vadd.xlane.f32.xlu0 %v584
        %v586 = vpop.xlane.xlu0 %585
        %v587 = vmul.f32 %v586, %v569
        %v588 = vrsqrt.pop %v587
        %v589 = vmul.f32 %v587, %v588
        %vm590 = vcmp.eq.f32.partialorder %v587, inf
        %v591 = vsel %vm590, %v587, %v589
        %vm592 = vcmp.eq.f32.partialorder %v587, 0.0
        %v593 = vand.u32 %v587, 2147483648
        %v594 = vsel %vm592, %v593, %v591
        %v595 = vmax.f32 %v577, %v594
        %v596 = vsub.f32 %v577, %v595
        %v597 = vmul.f32 %v596, 0.25
        %v598 = vmul.f32 %v597, 1.442695
        %v599 = vpow.pop %v598
        %v600 = vsub.f32 %v594, %v595
        %v601 = vmul.f32 %v600, 0.25
        %v602 = vmul.f32 %v601, 1.442695
        %v603 = vpow.pop %v602
        %v604 = vadd.f32 %v599, %v603
        %v605 = vrcp.pop %v604
        %v606 = vmul.f32 1.0, %v605
        %v607 = vmul.f32 %v599, %v606
        %v608 = vmul.f32 %v603, %v606
        %v609 = vld [vmem:[%s1] sm:$0xff]
        %v610 = vld [vmem:[%s1 + $0x8] sm:$0xff]
        %v611 = vld [vmem:[%s1 + $0x10] sm:$0xff]
        %v612 = vld [vmem:[%s1 + $0x18] sm:$0xff]
        %v613 = vld [vmem:[%s1 + $0x20] sm:$0xff]
        %v614 = vld [vmem:[%s1 + $0x28] sm:$0xff]
        %v615 = vld [vmem:[%s1 + $0x30] sm:$0xff]
        %v616 = vld [vmem:[%s1 + $0x38] sm:$0xff]
        %v617 = vld [vmem:[%s2] sm:$0x1]
        %v619 = vsel %vm217, %v397, 0
        %621 = vmatprep.subr.mxu0 0.0
        %622 = vmatpush1.msra.mxu0 %v609
        %623 = vmatprep.subr.mxu0 0.0
        %624 = vmatpush1.msra.mxu0 %v610
        %625 = vmatprep.subr.mxu0 0.0
        %626 = vmatpush1.msra.mxu0 %v611
        %627 = vmatprep.subr.mxu0 0.0
        %628 = vmatpush1.msra.mxu0 %v612
        %629 = vmatprep.subr.mxu0 0.0
        %630 = vmatpush1.msra.mxu0 %v613
        %631 = vmatprep.subr.mxu0 0.0
        %632 = vmatpush1.msra.mxu0 %v614
        %633 = vmatprep.subr.mxu0 0.0
        %634 = vmatpush1.msra.mxu0 %v615
        %635 = vmatprep.subr.mxu0 0.0
        %636 = vmatpush1.msra.mxu0 %v616
        %637 = vmatprep.subr.mxu0 0.0
        %638 = vmatpush1.msra.mxu0 0.0
        %639 = vmatprep.subr.mxu0 0.0
        %640 = vmatpush1.msra.mxu0 0.0
        %641 = vmatprep.subr.mxu0 0.0
        %642 = vmatpush1.msra.mxu0 0.0
        %643 = vmatprep.subr.mxu0 0.0
        %644 = vmatpush1.msra.mxu0 0.0
        %645 = vmatprep.subr.mxu0 0.0
        %646 = vmatpush1.msra.mxu0 0.0
        %647 = vmatprep.subr.mxu0 0.0
        %648 = vmatpush1.msra.mxu0 0.0
        %649 = vmatprep.subr.mxu0 0.0
        %650 = vmatpush1.msra.mxu0 0.0
        %651 = vmatprep.subr.mxu0 0.0
        %652 = vmatpush1.msra.mxu0 0.0
        %653 = vmatprep.subr.mxu0 0.0
        %654 = vmatpush1.msra.mxu0 0.0
        %655 = vmatprep.subr.mxu0 0.0
        %656 = vmatpush1.msra.mxu0 0.0
        %657 = vmatprep.subr.mxu0 0.0
        %658 = vmatpush1.msra.mxu0 0.0
        %659 = vmatprep.subr.mxu0 0.0
        %660 = vmatpush1.msra.mxu0 0.0
        %661 = vmatprep.subr.mxu0 0.0
        %662 = vmatpush1.msra.mxu0 0.0
        %663 = vmatprep.subr.mxu0 0.0
        %664 = vmatpush1.msra.mxu0 0.0
        %665 = vmatprep.subr.mxu0 0.0
        %666 = vmatpush1.msra.mxu0 0.0
        %667 = vmatprep.subr.mxu0 0.0
        %668 = vmatpush1.msra.mxu0 0.0
        %669 = vmatprep.subr.mxu0 0.0
        %670 = vmatpush1.msra.mxu0 0.0
        %671 = vmatprep.subr.mxu0 0.0
        %672 = vmatpush1.msra.mxu0 0.0
        %673 = vmatprep.subr.mxu0 0.0
        %674 = vmatpush1.msra.mxu0 0.0
        %675 = vmatprep.subr.mxu0 0.0
        %676 = vmatpush1.msra.mxu0 0.0
        %677 = vmatprep.subr.mxu0 0.0
        %678 = vmatpush1.msra.mxu0 0.0
        %679 = vmatprep.subr.mxu0 0.0
        %680 = vmatpush1.msra.mxu0 0.0
        %681 = vmatprep.subr.mxu0 0.0
        %682 = vmatpush1.msra.mxu0 0.0
        %683 = vmatprep.subr.mxu0 0.0
        %684 = vmatpush1.msra.mxu0 0.0
        %685 = vmatprep.mubr.f32.mxu0 0.0
        %686 = vmatmul.mubr.f32.gmra.mrb[0].mxu0 %v619
        %v687 = vpop.f32.mrb[0].mxu0
        %v688 = vadd.f32 %v617, %v687
        %v689 = vpop.f32.mrb[0].mxu0
        %690 = vdwg.mxu0
        %v691 = vld [vmem:[%s3] sm:$0xff]
        %v692 = vld [vmem:[%s3 + $0x8] sm:$0xff]
        %v693 = vld [vmem:[%s3 + $0x10] sm:$0xff]
        %v694 = vld [vmem:[%s3 + $0x18] sm:$0xff]
        %v695 = vld [vmem:[%s3 + $0x20] sm:$0xff]
        %v696 = vld [vmem:[%s3 + $0x28] sm:$0xff]
        %v697 = vld [vmem:[%s3 + $0x30] sm:$0xff]
        %v698 = vld [vmem:[%s3 + $0x38] sm:$0xff]
        %v699 = vld [vmem:[%s4] sm:$0x1]
        %v701 = vsel %vm217, %v557, 0
        %703 = vmatprep.subr.mxu0 0.0
        %704 = vmatpush1.msra.mxu0 %v691
        %705 = vmatprep.subr.mxu0 0.0
        %706 = vmatpush1.msra.mxu0 %v692
        %707 = vmatprep.subr.mxu0 0.0
        %708 = vmatpush1.msra.mxu0 %v693
        %709 = vmatprep.subr.mxu0 0.0
        %710 = vmatpush1.msra.mxu0 %v694
        %711 = vmatprep.subr.mxu0 0.0
        %712 = vmatpush1.msra.mxu0 %v695
        %713 = vmatprep.subr.mxu0 0.0
        %714 = vmatpush1.msra.mxu0 %v696
        %715 = vmatprep.subr.mxu0 0.0
        %716 = vmatpush1.msra.mxu0 %v697
        %717 = vmatprep.subr.mxu0 0.0
        %718 = vmatpush1.msra.mxu0 %v698
        %719 = vmatprep.subr.mxu0 0.0
        %720 = vmatpush1.msra.mxu0 0.0
        %721 = vmatprep.subr.mxu0 0.0
        %722 = vmatpush1.msra.mxu0 0.0
        %723 = vmatprep.subr.mxu0 0.0
        %724 = vmatpush1.msra.mxu0 0.0
        %725 = vmatprep.subr.mxu0 0.0
        %726 = vmatpush1.msra.mxu0 0.0
        %727 = vmatprep.subr.mxu0 0.0
        %728 = vmatpush1.msra.mxu0 0.0
        %729 = vmatprep.subr.mxu0 0.0
        %730 = vmatpush1.msra.mxu0 0.0
        %731 = vmatprep.subr.mxu0 0.0
        %732 = vmatpush1.msra.mxu0 0.0
        %733 = vmatprep.subr.mxu0 0.0
        %734 = vmatpush1.msra.mxu0 0.0
        %735 = vmatprep.subr.mxu0 0.0
        %736 = vmatpush1.msra.mxu0 0.0
        %737 = vmatprep.subr.mxu0 0.0
        %738 = vmatpush1.msra.mxu0 0.0
        %739 = vmatprep.subr.mxu0 0.0
        %740 = vmatpush1.msra.mxu0 0.0
        %741 = vmatprep.subr.mxu0 0.0
        %742 = vmatpush1.msra.mxu0 0.0
        %743 = vmatprep.subr.mxu0 0.0
        %744 = vmatpush1.msra.mxu0 0.0
        %745 = vmatprep.subr.mxu0 0.0
        %746 = vmatpush1.msra.mxu0 0.0
        %747 = vmatprep.subr.mxu0 0.0
        %748 = vmatpush1.msra.mxu0 0.0
        %749 = vmatprep.subr.mxu0 0.0
        %750 = vmatpush1.msra.mxu0 0.0
        %751 = vmatprep.subr.mxu0 0.0
        %752 = vmatpush1.msra.mxu0 0.0
        %753 = vmatprep.subr.mxu0 0.0
        %754 = vmatpush1.msra.mxu0 0.0
        %755 = vmatprep.subr.mxu0 0.0
        %756 = vmatpush1.msra.mxu0 0.0
        %757 = vmatprep.subr.mxu0 0.0
        %758 = vmatpush1.msra.mxu0 0.0
        %759 = vmatprep.subr.mxu0 0.0
        %760 = vmatpush1.msra.mxu0 0.0
        %761 = vmatprep.subr.mxu0 0.0
        %762 = vmatpush1.msra.mxu0 0.0
        %763 = vmatprep.subr.mxu0 0.0
        %764 = vmatpush1.msra.mxu0 0.0
        %765 = vmatprep.subr.mxu0 0.0
        %766 = vmatpush1.msra.mxu0 0.0
        %767 = vmatprep.mubr.f32.mxu0 0.0
        %768 = vmatmul.mubr.f32.gmra.mrb[0].mxu0 %v701
        %v769 = vpop.f32.mrb[0].mxu0
        %v770 = vadd.f32 %v699, %v769
        %v771 = vpop.f32.mrb[0].mxu0
        %772 = vdwg.mxu0
        %v773 = vmul.f32 %v688, %v607
        %v774 = vmul.f32 %v770, %v608
        %v775 = vadd.f32 %v773, %v774
        %s776 = scalar_lea.vmem [#allocation2], %s17
        %vm777 = vcmask 253952
        %778 = vst.msk [vmem:[%s776] sm:$0x1] %vm777, %v775
        // Predicated region
        $region41: #{tpu_custom_call.1} parent=39 // pred_check
          %p779 = pneg %p140
        $region42: #{tpu_custom_call.1} parent=39 // pred_check_branch
          %781 = sbr.rel (%p779) target = $region44
        $region43: #{tpu_custom_call.1} parent=39 // pred_region
          %s783 = ssub.s32 32, 32
          %784 = vsyncadd [#allocation3], %s783
          %s786 = sshll.u32 [#allocation2], 4
          %s787 = int_to_ptr.vmem [resolvable:$true] %s786
          %789 = dma.vmem_to_hbm [thread:$0]  %s787, 32, %s5, [#allocation3]
        $region44: #{tpu_custom_call.1} parent=39 // pred_fallthru
          _
        // Predicated region
        $region45: #{tpu_custom_call.1} parent=39 // pred_check
          %p790 = pneg %p140
        $region46: #{tpu_custom_call.1} parent=39 // pred_check_branch
          %792 = sbr.rel (%p790) target = $region48
        $region47: #{tpu_custom_call.1} parent=39 // pred_region
          %793 = dma.done [#allocation3], 32
        $region48: #{tpu_custom_call.1} parent=39 // pred_fallthru
          _
      $region40: #{tpu_custom_call.1} parent=5 // pred_fallthru
        _
      %p794 = scmp.le.s32.totalorder 2, %s12
      // Predicated region
      $region49: #{tpu_custom_call.1} parent=5 // pred_check
        %p795 = pneg %p794
      $region50: #{tpu_custom_call.1} parent=5 // pred_check_branch
        %797 = sbr.rel (%p795) target = $region52
      $region51: #{tpu_custom_call.1} parent=5 // pred_region
        %s798 = ssub.s32 %s12, 2
      $region52: #{tpu_custom_call.1} parent=5 // pred_fallthru
        _
    $region6: #{tpu_custom_call.1} parent=1 // loop_footer
      %s16 = sadd.s32 1, %s12
    $region7: #{tpu_custom_call.1} parent=1 // loop_footer_branch
      %11 = sbr.rel target = $region3
    $region8: #{tpu_custom_call.1} parent=1 // loop_exit
      _
    %799 = vsyncpa [#allocation3], 1
    %s800 = scalar_lea.sflag [#allocation3], 1
    %801 = vsyncpa %s800, 1

</llo_original>
